<compile_context>
chip_gen: v7x
topology: tpu7x:2x2x1
jax: 0.10.0
libtpu: 0.0.40
codegen_flags: <defaults>
</compile_context>

<pallas_src>
import math

import jax
import jax.numpy as jnp
from jax.experimental import pallas as pl
from jax.experimental.pallas import tpu as pltpu


def _round_up(x, m):
    return ((x + m - 1) // m) * m


def _largest_divisor_leq(n, cap):
    best = 1
    for d in range(1, min(n, cap) + 1):
        if n % d == 0:
            best = d
    return best


def _resident_spec(shape):
    nd = len(shape)
    return pl.BlockSpec(tuple(shape), lambda *_: (0,) * nd)
    # TODO(synk): once H grows, add pipeline_mode=pl.Buffered(1) here to halve
    # resident-weight VMEM (matters for v7x 64 MiB / v5e 16 MiB scoped VMEM).


# ----------------------------------------------------------------------------
# Pass 1: batched pre-pass over flattened (T*BP) rows -- h-independent work.
#   out[:, 0:3HP] = gi      = embedding(x_mix, mask) @ [W_ir|W_iz|W_in] + b_i
#   out[:, 3HP: ] = gamma_h = exp(-relu(gamma_h_param) * delta_t_h)
# ----------------------------------------------------------------------------
def grud_prepass_kernel(x_ref, xl_ref, m_ref, dtx_ref, dth_ref,
                        vec_i_ref, vec_h_ref, w_emb_ref, w_gi_ref, out_ref):
    f32 = jnp.float32
    IP = x_ref.shape[-1]
    HP = vec_h_ref.shape[-1] // 3

    mask = m_ref[...]
    # gamma_x = exp(-relu(param) * delta_t_x); imputation mix.
    gamma_x = jnp.exp(-jnp.maximum(vec_i_ref[0:1, :], 0.0) * dtx_ref[...])
    x_mix = mask * x_ref[...] + (1.0 - mask) * (gamma_x * xl_ref[...])

    # embedding Linear(2I -> I) on cat([x, mask], -1): packed weight split on
    # its input axis (avoids an in-kernel concat).
    x_emb = (jnp.dot(x_mix, w_emb_ref[0:IP, :], preferred_element_type=f32)
             + jnp.dot(mask, w_emb_ref[IP:2 * IP, :], preferred_element_type=f32)
             + vec_i_ref[1:2, :])

    # Fused GRU input projection: one [*, 3H] matmul (+ input-side biases).
    gi = jnp.dot(x_emb, w_gi_ref[...], preferred_element_type=f32) + vec_h_ref[0:1, :]

    # Hidden-state decay factor, precomputed here so no exp() is left on the
    # serial critical path.
    gamma_h = jnp.exp(-jnp.maximum(vec_h_ref[1:2, 0:HP], 0.0) * dth_ref[...])

    out_ref[:, 0:3 * HP] = gi
    out_ref[:, 3 * HP:4 * HP] = gamma_h


# ----------------------------------------------------------------------------
# Pass 2: the serial recurrence.  One packed streamed input block per chunk,
# resident weights, h carried in VMEM scratch, Tc steps per grid iteration.
# ----------------------------------------------------------------------------
def grud_recurrence_kernel(pk_ref, h0_ref, w_gh_ref, b_h_ref, hseq_ref, h_scr):
    f32 = jnp.float32
    BP, HP = h0_ref.shape
    Tc = pk_ref.shape[0]

    @pl.when(pl.program_id(0) == 0)
    def _():
        h_scr[...] = h0_ref[...]

    # Hoisted out of the unrolled loop (JAX does not CSE broadcast_in_dim).
    b_h = jnp.broadcast_to(b_h_ref[...], (BP, 3 * HP))

    def step(i, h):
        blk = pk_ref[i]                                  # [BP, 4*HP]
        gi = blk[:, 0:3 * HP]
        gamma_h = blk[:, 3 * HP:4 * HP]
        hd = gamma_h * h
        gh = jnp.dot(hd, w_gh_ref[...], preferred_element_type=f32) + b_h
        r = jax.nn.sigmoid(gi[:, 0:HP] + gh[:, 0:HP])
        z = jax.nn.sigmoid(gi[:, HP:2 * HP] + gh[:, HP:2 * HP])
        n = jnp.tanh(gi[:, 2 * HP:3 * HP] + r * gh[:, 2 * HP:3 * HP])
        h_new = (1.0 - z) * n + z * hd
        hseq_ref[i] = h_new
        return h_new

    h_scr[...] = jax.lax.fori_loop(0, Tc, step, h_scr[...], unroll=True)


# ----------------------------------------------------------------------------
# Pass 3: batched output layer + softplus over all timesteps.
# ----------------------------------------------------------------------------
def grud_output_kernel(h_ref, w_out_ref, b_out_ref, ximp_ref):
    f32 = jnp.float32
    o = jnp.dot(h_ref[...], w_out_ref[...], preferred_element_type=f32) + b_out_ref[...]
    # softplus(o) = max(o, 0) + log(1 + exp(-|o|))  (numerically stable)
    ximp_ref[...] = jnp.maximum(o, 0.0) + jnp.log(1.0 + jnp.exp(-jnp.abs(o)))


# ----------------------------------------------------------------------------
# Wrappers
# ----------------------------------------------------------------------------
@jax.jit
def grud_forward_sequence(x_seq, x_last_seq, mask_seq, dtx_seq, dth_seq, h0, packed):
    """Runs T GRU-D steps.  x_seq/x_last_seq/mask_seq/dtx_seq: [T, B, I];
    dth_seq: [T, B]; h0: [B, H].  Returns (h_final [B, H], x_imputed [T, B, I])."""
    f32 = jnp.float32
    T, B, I = x_seq.shape
    H = h0.shape[-1]
    HP, IP = packed["w_out"].shape
    BP = _round_up(B, 8)
    TB = T * BP

    # ---- pad to lane/sublane-aligned shapes and flatten time*batch ----
    def pad_flat(a):
        a = jnp.pad(a.astype(f32), ((0, 0), (0, BP - B), (0, IP - I)))
        return a.reshape(TB, IP)

    xf, xlf, mf, dtxf = map(pad_flat, (x_seq, x_last_seq, mask_seq, dtx_seq))
    dthf = jnp.pad(dth_seq.astype(f32), ((0, 0), (0, BP - B))).reshape(TB, 1)
    h0p = jnp.pad(h0.astype(f32), ((0, BP - B), (0, HP - H)))

    # ---- pass 1: parallel over row tiles (uses both TCs on v7x) ----
    Tp = _largest_divisor_leq(T, max(1, 512 // BP))
    RT = Tp * BP                                   # rows per tile (multiple of 8)
    row_i = pl.BlockSpec((RT, IP), lambda r: (r, 0))

    packed_stream = pl.pallas_call(
        grud_prepass_kernel,
        grid=(TB // RT,),
        in_specs=[row_i, row_i, row_i, row_i,
                  pl.BlockSpec((RT, 1), lambda r: (r, 0)),
                  _resident_spec(packed["vec_i"].shape),
                  _resident_spec(packed["vec_h"].shape),
                  _resident_spec(packed["w_emb"].shape),
                  _resident_spec(packed["w_gi"].shape)],
        out_specs=pl.BlockSpec((RT, 4 * HP), lambda r: (r, 0)),
        out_shape=jax.ShapeDtypeStruct((TB, 4 * HP), f32),
        compiler_params=pltpu.CompilerParams(dimension_semantics=("parallel",)),
    )(xf, xlf, mf, dtxf, dthf,
      packed["vec_i"], packed["vec_h"], packed["w_emb"], packed["w_gi"])

    packed_stream = packed_stream.reshape(T, BP, 4 * HP)

    # ---- pass 2: serial recurrence, Tc timesteps per grid iteration ----
    # NOTE: when scaling Tc/H, re-derive VMEM use vs v7x's 64 MiB and set
    # vmem_limit_bytes explicitly; at these shapes defaults are ample.
    Tc = _largest_divisor_leq(T, 16)
    h_seq = pl.pallas_call(
        grud_recurrence_kernel,
        grid=(T // Tc,),
        in_specs=[pl.BlockSpec((Tc, BP, 4 * HP), lambda c: (c, 0, 0)),
                  _resident_spec((BP, HP)),
                  _resident_spec(packed["w_gh"].shape),
                  _resident_spec(packed["b_h"].shape)],
        out_specs=pl.BlockSpec((Tc, BP, HP), lambda c: (c, 0, 0)),
        out_shape=jax.ShapeDtypeStruct((T, BP, HP), f32),
        scratch_shapes=[pltpu.VMEM((BP, HP), f32)],
        compiler_params=pltpu.CompilerParams(dimension_semantics=("arbitrary",)),
    )(packed_stream, h0p, packed["w_gh"], packed["b_h"])

    # ---- pass 3: batched output layer + softplus, parallel over row tiles ----
    h_flat = h_seq.reshape(TB, HP)
    ximp_flat = pl.pallas_call(
        grud_output_kernel,
        grid=(TB // RT,),
        in_specs=[pl.BlockSpec((RT, HP), lambda r: (r, 0)),
                  _resident_spec(packed["w_out"].shape),
                  _resident_spec(packed["b_out"].shape)],
        out_specs=pl.BlockSpec((RT, IP), lambda r: (r, 0)),
        out_shape=jax.ShapeDtypeStruct((TB, IP), f32),
        compiler_params=pltpu.CompilerParams(dimension_semantics=("parallel",)),
    )(h_flat, packed["w_out"], packed["b_out"])

    h_final = h_seq[T - 1, :B, :H]
    ximp_seq = ximp_flat.reshape(T, BP, IP)[:, :B, :I]
    return h_final, ximp_seq


def grud_forward(x, x_last_obs, mask, delta_t_x, delta_t_h, h, packed):
    """Single GRU-D cell step (exactly the PyTorch module's forward)."""
    h_new, ximp_seq = grud_forward_sequence(
        x[None], x_last_obs[None], mask[None], delta_t_x[None],
        delta_t_h[None], h, packed)
    return h_new, ximp_seq[0]


# ----------------------------------------------------------------------------
# Parameters: logical (per-gate, [in, out]) params for the reference, plus a
# packing step that builds the padded / fused device-side tensors.
# ----------------------------------------------------------------------------
def make_params(key, input_size, hidden_size):
    I, H = input_size, hidden_size
    ks = jax.random.split(key, 24)

    def xavier(k, fan_in, fan_out):
        lim = math.sqrt(6.0 / (fan_in + fan_out))
        return jax.random.uniform(k, (fan_in, fan_out), jnp.float32, -lim, lim)

    def unif(k, shape, bound):
        return jax.random.uniform(k, shape, jnp.float32, -bound, bound)

    gru_b = 1.0 / math.sqrt(H)
    lin_emb_b = 1.0 / math.sqrt(2 * I)
    lin_out_b = 1.0 / math.sqrt(H)

    w_emb = xavier(ks[0], 2 * I, I)  # stored [in, out]

    return dict(
        gamma_x=0.1 * jax.random.normal(ks[1], (1, I), jnp.float32),
        gamma_h=0.1 * jax.random.normal(ks[2], (1, H), jnp.float32),
        w_emb_x=w_emb[:I, :],
        w_emb_m=w_emb[I:, :],
        b_emb=unif(ks[3], (1, I), lin_emb_b),
        w_ir=unif(ks[4], (I, H), gru_b),
        w_iz=unif(ks[5], (I, H), gru_b),
        w_in=unif(ks[6], (I, H), gru_b),
        w_hr=unif(ks[7], (H, H), gru_b),
        w_hz=unif(ks[8], (H, H), gru_b),
        w_hn=unif(ks[9], (H, H), gru_b),
        b_ir=unif(ks[10], (1, H), gru_b),
        b_iz=unif(ks[11], (1, H), gru_b),
        b_in=unif(ks[12], (1, H), gru_b),
        b_hr=unif(ks[13], (1, H), gru_b),
        b_hz=unif(ks[14], (1, H), gru_b),
        b_hn=unif(ks[15], (1, H), gru_b),
        w_out=xavier(ks[16], H, I),
        b_out=unif(ks[17], (1, I), lin_out_b),
    )


def pack_params(p, I, H):
    """Pack / zero-pad parameters into lane-aligned tensors for the kernels."""
    IP = _round_up(I, 128)
    HP = _round_up(H, 128)
    f32 = jnp.float32

    w_emb = jnp.zeros((2 * IP, IP), f32)
    w_emb = w_emb.at[:I, :I].set(p["w_emb_x"])
    w_emb = w_emb.at[IP:IP + I, :I].set(p["w_emb_m"])

    w_gi = jnp.zeros((IP, 3 * HP), f32)
    w_gi = w_gi.at[:I, 0 * HP:0 * HP + H].set(p["w_ir"])
    w_gi = w_gi.at[:I, 1 * HP:1 * HP + H].set(p["w_iz"])
    w_gi = w_gi.at[:I, 2 * HP:2 * HP + H].set(p["w_in"])

    w_gh = jnp.zeros((HP, 3 * HP), f32)
    w_gh = w_gh.at[:H, 0 * HP:0 * HP + H].set(p["w_hr"])
    w_gh = w_gh.at[:H, 1 * HP:1 * HP + H].set(p["w_hz"])
    w_gh = w_gh.at[:H, 2 * HP:2 * HP + H].set(p["w_hn"])

    w_out = jnp.zeros((HP, IP), f32).at[:H, :I].set(p["w_out"])

    vec_i = jnp.zeros((2, IP), f32)                # row0: gamma_x param, row1: b_emb
    vec_i = vec_i.at[0, :I].set(p["gamma_x"].reshape(-1))
    vec_i = vec_i.at[1, :I].set(p["b_emb"].reshape(-1))

    vec_h = jnp.zeros((2, 3 * HP), f32)            # row0: b_i gates, row1[:H]: gamma_h
    vec_h = vec_h.at[0, 0 * HP:0 * HP + H].set(p["b_ir"].reshape(-1))
    vec_h = vec_h.at[0, 1 * HP:1 * HP + H].set(p["b_iz"].reshape(-1))
    vec_h = vec_h.at[0, 2 * HP:2 * HP + H].set(p["b_in"].reshape(-1))
    vec_h = vec_h.at[1, :H].set(p["gamma_h"].reshape(-1))

    b_h = jnp.zeros((1, 3 * HP), f32)              # hidden-side GRU biases
    b_h = b_h.at[0, 0 * HP:0 * HP + H].set(p["b_hr"].reshape(-1))
    b_h = b_h.at[0, 1 * HP:1 * HP + H].set(p["b_hz"].reshape(-1))
    b_h = b_h.at[0, 2 * HP:2 * HP + H].set(p["b_hn"].reshape(-1))

    b_out = jnp.zeros((1, IP), f32).at[0, :I].set(p["b_out"].reshape(-1))

    return dict(w_emb=w_emb, w_gi=w_gi, w_gh=w_gh, w_out=w_out,
                vec_i=vec_i, vec_h=vec_h, b_h=b_h, b_out=b_out)


# ----------------------------------------------------------------------------
# Pure-JAX reference (un-fused, un-padded) for sanity checks.
# ----------------------------------------------------------------------------
def grud_reference(x, x_last_obs, mask, delta_t_x, delta_t_h, h, p):
    gamma_x = jnp.exp(-jnp.maximum(p["gamma_x"], 0.0) * delta_t_x)
    gamma_h = jnp.exp(-jnp.maximum(p["gamma_h"], 0.0) * delta_t_h[:, None])
    x = mask * x + (1 - mask) * (gamma_x * x_last_obs)
    h = gamma_h * h
    x_emb = x @ p["w_emb_x"] + mask @ p["w_emb_m"] + p["b_emb"]
    r = jax.nn.sigmoid(x_emb @ p["w_ir"] + p["b_ir"] + h @ p["w_hr"] + p["b_hr"])
    z = jax.nn.sigmoid(x_emb @ p["w_iz"] + p["b_iz"] + h @ p["w_hz"] + p["b_hz"])
    n = jnp.tanh(x_emb @ p["w_in"] + p["b_in"] + r * (h @ p["w_hn"] + p["b_hn"]))
    h_new = (1 - z) * n + z * h
    o = h_new @ p["w_out"] + p["b_out"]
    return h_new, jax.nn.softplus(o)


if __name__ == "__main__":
    B, I, H, T = 4, 16, 32, 8

    key = jax.random.PRNGKey(0)
    (kp, kx, kxl, km, kdx, kdh, kh,
     ksx, ksxl, ksm, ksdx, ksdh, ksh) = jax.random.split(key, 13)

    params = make_params(kp, I, H)
    packed = pack_params(params, I, H)

    # ---- single-step call (matches the PyTorch module's forward) ----
    x = jax.random.normal(kx, (B, I), jnp.float32)
    x_last = jax.random.normal(kxl, (B, I), jnp.float32)
    mask = (jax.random.uniform(km, (B, I)) > 0.5).astype(jnp.float32)
    dtx = jax.random.uniform(kdx, (B, I), jnp.float32, 0.0, 3.0)
    dth = jax.random.uniform(kdh, (B,), jnp.float32, 0.0, 3.0)
    h = jax.random.normal(kh, (B, H), jnp.float32)

    h_new, x_imp = grud_forward(x, x_last, mask, dtx, dth, h, packed)
    jax.block_until_ready((h_new, x_imp))

    h_exp, ximp_exp = grud_reference(x, x_last, mask, dtx, dth, h, params)
    assert h_new.shape == (B, H) and x_imp.shape == (B, I)
    assert jnp.allclose(h_new, h_exp, atol=1e-4, rtol=1e-4)
    assert jnp.allclose(x_imp, ximp_exp, atol=1e-4, rtol=1e-4)

    # ---- multi-step: batched pre/post passes + serial recurrence kernel ----
    x_seq = jax.random.normal(ksx, (T, B, I), jnp.float32)
    xl_seq = jax.random.normal(ksxl, (T, B, I), jnp.float32)
    m_seq = (jax.random.uniform(ksm, (T, B, I)) > 0.5).astype(jnp.float32)
    dtx_seq = jax.random.uniform(ksdx, (T, B, I), jnp.float32, 0.0, 3.0)
    dth_seq = jax.random.uniform(ksdh, (T, B), jnp.float32, 0.0, 3.0)
    h0 = jax.random.normal(ksh, (B, H), jnp.float32)

    h_T, ximp_seq = grud_forward_sequence(
        x_seq, xl_seq, m_seq, dtx_seq, dth_seq, h0, packed)
    jax.block_until_ready((h_T, ximp_seq))

    def scan_step(h_c, inp):
        xt, xlt, mt, dxt, dht = inp
        h_n, xi = grud_reference(xt, xlt, mt, dxt, dht, h_c, params)
        return h_n, xi

    h_T_exp, ximp_seq_exp = jax.lax.scan(
        scan_step, h0, (x_seq, xl_seq, m_seq, dtx_seq, dth_seq))

    assert h_T.shape == (B, H) and ximp_seq.shape == (T, B, I)
    assert jnp.allclose(h_T, h_T_exp, atol=1e-4, rtol=1e-4)
    assert jnp.allclose(ximp_seq, ximp_seq_exp, atol=1e-4, rtol=1e-4)

    print("KERNEL_OK")
</pallas_src>

<mosaic_0001>
module attributes {stable_mosaic.version = 11 : i64} {
  func.func @grud_prepass_kernel(%arg0: i32, %arg1: memref<8x128xf32, #tpu.memory_space<vmem>>, %arg2: memref<8x128xf32, #tpu.memory_space<vmem>>, %arg3: memref<8x128xf32, #tpu.memory_space<vmem>>, %arg4: memref<8x128xf32, #tpu.memory_space<vmem>>, %arg5: memref<8x1xf32, #tpu.memory_space<vmem>>, %arg6: memref<2x128xf32, #tpu.memory_space<vmem>>, %arg7: memref<2x384xf32, #tpu.memory_space<vmem>>, %arg8: memref<256x128xf32, #tpu.memory_space<vmem>>, %arg9: memref<128x384xf32, #tpu.memory_space<vmem>>, %arg10: memref<8x512xf32, #tpu.memory_space<vmem>>) attributes {dimension_semantics = [#tpu.dimension_semantics<parallel>], iteration_bounds = array<i64: 1>, scalar_prefetch = 0 : i64, scratch_operands = 0 : i64, tpu.core_type = #tpu.core_type<tc>, window_params = [{transform_indices = @transform_0, window_bounds = array<i64: 8, 128>}, {transform_indices = @transform_1, window_bounds = array<i64: 8, 128>}, {transform_indices = @transform_2, window_bounds = array<i64: 8, 128>}, {transform_indices = @transform_3, window_bounds = array<i64: 8, 128>}, {transform_indices = @transform_4, window_bounds = array<i64: 8, 1>}, {pipeline_mode = #tpu.pipeline_mode<synchronous>, transform_indices = @transform_5, window_bounds = array<i64: 2, 128>}, {pipeline_mode = #tpu.pipeline_mode<synchronous>, transform_indices = @transform_6, window_bounds = array<i64: 2, 384>}, {pipeline_mode = #tpu.pipeline_mode<synchronous>, transform_indices = @transform_7, window_bounds = array<i64: 256, 128>}, {pipeline_mode = #tpu.pipeline_mode<synchronous>, transform_indices = @transform_8, window_bounds = array<i64: 128, 384>}, {transform_indices = @transform_9, window_bounds = array<i64: 8, 512>}]} {
    %c0 = arith.constant 0 : index
    %c0_0 = arith.constant 0 : index
    %0 = vector.load %arg3[%c0, %c0_0] : memref<8x128xf32, #tpu.memory_space<vmem>>, vector<8x128xf32>
    %c0_1 = arith.constant 0 : index
    %c0_2 = arith.constant 0 : index
    %1 = vector.load %arg6[%c0_1, %c0_2] : memref<2x128xf32, #tpu.memory_space<vmem>>, vector<1x128xf32>
    %cst = arith.constant 0.000000e+00 : f32
    %2 = vector.broadcast %cst : f32 to vector<1x128xf32>
    %3 = arith.maximumf %1, %2 : vector<1x128xf32>
    %cst_3 = arith.constant 0.000000e+00 : f32
    %4 = vector.broadcast %cst_3 : f32 to vector<1x128xf32>
    %5 = arith.subf %4, %3 : vector<1x128xf32>
    %c0_4 = arith.constant 0 : index
    %c0_5 = arith.constant 0 : index
    %6 = vector.load %arg4[%c0_4, %c0_5] : memref<8x128xf32, #tpu.memory_space<vmem>>, vector<8x128xf32>
    %7 = vector.broadcast %5 : vector<1x128xf32> to vector<8x128xf32>
    %8 = arith.mulf %7, %6 : vector<8x128xf32>
    %9 = math.exp %8 : vector<8x128xf32>
    %c0_6 = arith.constant 0 : index
    %c0_7 = arith.constant 0 : index
    %10 = vector.load %arg1[%c0_6, %c0_7] : memref<8x128xf32, #tpu.memory_space<vmem>>, vector<8x128xf32>
    %11 = arith.mulf %0, %10 : vector<8x128xf32>
    %cst_8 = arith.constant 1.000000e+00 : f32
    %12 = vector.broadcast %cst_8 : f32 to vector<8x128xf32>
    %13 = arith.subf %12, %0 : vector<8x128xf32>
    %c0_9 = arith.constant 0 : index
    %c0_10 = arith.constant 0 : index
    %14 = vector.load %arg2[%c0_9, %c0_10] : memref<8x128xf32, #tpu.memory_space<vmem>>, vector<8x128xf32>
    %15 = arith.mulf %9, %14 : vector<8x128xf32>
    %16 = arith.mulf %13, %15 : vector<8x128xf32>
    %17 = arith.addf %11, %16 : vector<8x128xf32>
    %c0_11 = arith.constant 0 : index
    %c0_12 = arith.constant 0 : index
    %18 = vector.load %arg8[%c0_11, %c0_12] : memref<256x128xf32, #tpu.memory_space<vmem>>, vector<128x128xf32>
    %cst_13 = arith.constant dense<0.000000e+00> : vector<8x128xf32>
    %19 = tpu.matmul %17, %18, %cst_13 {dimension_numbers = #tpu.dot_dimension_numbers<[1], [0], [0], [1], [0, 0, 1, 1], [], []>} : vector<8x128xf32>, vector<128x128xf32>, vector<8x128xf32> -> vector<8x128xf32>
    %c128 = arith.constant 128 : index
    %c0_14 = arith.constant 0 : index
    %20 = vector.load %arg8[%c128, %c0_14] : memref<256x128xf32, #tpu.memory_space<vmem>>, vector<128x128xf32>
    %cst_15 = arith.constant dense<0.000000e+00> : vector<8x128xf32>
    %21 = tpu.matmul %0, %20, %cst_15 {dimension_numbers = #tpu.dot_dimension_numbers<[1], [0], [0], [1], [0, 0, 1, 1], [], []>} : vector<8x128xf32>, vector<128x128xf32>, vector<8x128xf32> -> vector<8x128xf32>
    %22 = arith.addf %19, %21 : vector<8x128xf32>
    %c1 = arith.constant 1 : index
    %c0_16 = arith.constant 0 : index
    %23 = vector.load %arg6[%c1, %c0_16] : memref<2x128xf32, #tpu.memory_space<vmem>>, vector<1x128xf32>
    %24 = vector.broadcast %23 : vector<1x128xf32> to vector<8x128xf32>
    %25 = arith.addf %22, %24 : vector<8x128xf32>
    %c0_17 = arith.constant 0 : index
    %c0_18 = arith.constant 0 : index
    %26 = vector.load %arg9[%c0_17, %c0_18] : memref<128x384xf32, #tpu.memory_space<vmem>>, vector<128x384xf32>
    %cst_19 = arith.constant dense<0.000000e+00> : vector<8x384xf32>
    %27 = tpu.matmul %25, %26, %cst_19 {dimension_numbers = #tpu.dot_dimension_numbers<[1], [0], [0], [1], [0, 0, 1, 1], [], []>} : vector<8x128xf32>, vector<128x384xf32>, vector<8x384xf32> -> vector<8x384xf32>
    %c0_20 = arith.constant 0 : index
    %c0_21 = arith.constant 0 : index
    %28 = vector.load %arg7[%c0_20, %c0_21] : memref<2x384xf32, #tpu.memory_space<vmem>>, vector<1x384xf32>
    %29 = vector.broadcast %28 : vector<1x384xf32> to vector<8x384xf32>
    %30 = arith.addf %27, %29 : vector<8x384xf32>
    %c1_22 = arith.constant 1 : index
    %c0_23 = arith.constant 0 : index
    %31 = vector.load %arg7[%c1_22, %c0_23] : memref<2x384xf32, #tpu.memory_space<vmem>>, vector<1x128xf32>
    %cst_24 = arith.constant 0.000000e+00 : f32
    %32 = vector.broadcast %cst_24 : f32 to vector<1x128xf32>
    %33 = arith.maximumf %31, %32 : vector<1x128xf32>
    %cst_25 = arith.constant 0.000000e+00 : f32
    %34 = vector.broadcast %cst_25 : f32 to vector<1x128xf32>
    %35 = arith.subf %34, %33 : vector<1x128xf32>
    %c0_26 = arith.constant 0 : index
    %c0_27 = arith.constant 0 : index
    %36 = vector.load %arg5[%c0_26, %c0_27] : memref<8x1xf32, #tpu.memory_space<vmem>>, vector<8x1xf32>
    %37 = vector.broadcast %35 : vector<1x128xf32> to vector<8x128xf32>
    %38 = vector.broadcast %36 : vector<8x1xf32> to vector<8x128xf32>
    %39 = arith.mulf %37, %38 : vector<8x128xf32>
    %40 = math.exp %39 : vector<8x128xf32>
    %c0_28 = arith.constant 0 : index
    %c0_29 = arith.constant 0 : index
    %41 = vector.load %arg10[%c0_28, %c0_29] : memref<8x512xf32, #tpu.memory_space<vmem>>, vector<8x384xf32>
    tpu.vector_store %arg10[%c0_28, %c0_29], %30 {strides = array<i32>} : memref<8x512xf32, #tpu.memory_space<vmem>>, vector<8x384xf32>,
    %c0_30 = arith.constant 0 : index
    %c384 = arith.constant 384 : index
    %42 = vector.load %arg10[%c0_30, %c384] : memref<8x512xf32, #tpu.memory_space<vmem>>, vector<8x128xf32>
    tpu.vector_store %arg10[%c0_30, %c384], %40 {strides = array<i32>} : memref<8x512xf32, #tpu.memory_space<vmem>>, vector<8x128xf32>,
    return
  }
  func.func @transform_0(%arg0: i32) -> (i32, i32) {
    %c0_i32 = arith.constant 0 : i32
    %c0_i32_0 = arith.constant 0 : i32
    return %arg0, %c0_i32 : i32, i32
  }
  func.func @transform_1(%arg0: i32) -> (i32, i32) {
    %c0_i32 = arith.constant 0 : i32
    %c0_i32_0 = arith.constant 0 : i32
    return %arg0, %c0_i32 : i32, i32
  }
  func.func @transform_2(%arg0: i32) -> (i32, i32) {
    %c0_i32 = arith.constant 0 : i32
    %c0_i32_0 = arith.constant 0 : i32
    return %arg0, %c0_i32 : i32, i32
  }
  func.func @transform_3(%arg0: i32) -> (i32, i32) {
    %c0_i32 = arith.constant 0 : i32
    %c0_i32_0 = arith.constant 0 : i32
    return %arg0, %c0_i32 : i32, i32
  }
  func.func @transform_4(%arg0: i32) -> (i32, i32) {
    %c0_i32 = arith.constant 0 : i32
    %c0_i32_0 = arith.constant 0 : i32
    return %arg0, %c0_i32 : i32, i32
  }
  func.func @transform_5(%arg0: i32) -> (i32, i32) {
    %c0_i32 = arith.constant 0 : i32
    %c0_i32_0 = arith.constant 0 : i32
    %c0_i32_1 = arith.constant 0 : i32
    return %c0_i32, %c0_i32_0 : i32, i32
  }
  func.func @transform_6(%arg0: i32) -> (i32, i32) {
    %c0_i32 = arith.constant 0 : i32
    %c0_i32_0 = arith.constant 0 : i32
    %c0_i32_1 = arith.constant 0 : i32
    return %c0_i32, %c0_i32_0 : i32, i32
  }
  func.func @transform_7(%arg0: i32) -> (i32, i32) {
    %c0_i32 = arith.constant 0 : i32
    %c0_i32_0 = arith.constant 0 : i32
    %c0_i32_1 = arith.constant 0 : i32
    return %c0_i32, %c0_i32_0 : i32, i32
  }
  func.func @transform_8(%arg0: i32) -> (i32, i32) {
    %c0_i32 = arith.constant 0 : i32
    %c0_i32_0 = arith.constant 0 : i32
    %c0_i32_1 = arith.constant 0 : i32
    return %c0_i32, %c0_i32_0 : i32, i32
  }
  func.func @transform_9(%arg0: i32) -> (i32, i32) {
    %c0_i32 = arith.constant 0 : i32
    %c0_i32_0 = arith.constant 0 : i32
    return %arg0, %c0_i32 : i32, i32
  }
}

module attributes {stable_mosaic.version = 11 : i64} {
  func.func @grud_recurrence_kernel(%arg0: i32, %arg1: memref<1x8x512xf32, #tpu.memory_space<vmem>>, %arg2: memref<8x128xf32, #tpu.memory_space<vmem>>, %arg3: memref<128x384xf32, #tpu.memory_space<vmem>>, %arg4: memref<1x384xf32, #tpu.memory_space<vmem>>, %arg5: memref<1x8x128xf32, #tpu.memory_space<vmem>>, %arg6: memref<8x128xf32, #tpu.memory_space<vmem>>) attributes {dimension_semantics = [#tpu.dimension_semantics<arbitrary>], iteration_bounds = array<i64: 1>, scalar_prefetch = 0 : i64, scratch_operands = 1 : i64, tpu.core_type = #tpu.core_type<tc>, window_params = [{transform_indices = @transform_0, window_bounds = array<i64: 1, 8, 512>}, {pipeline_mode = #tpu.pipeline_mode<synchronous>, transform_indices = @transform_1, window_bounds = array<i64: 8, 128>}, {pipeline_mode = #tpu.pipeline_mode<synchronous>, transform_indices = @transform_2, window_bounds = array<i64: 128, 384>}, {pipeline_mode = #tpu.pipeline_mode<synchronous>, transform_indices = @transform_3, window_bounds = array<i64: 1, 384>}, {transform_indices = @transform_4, window_bounds = array<i64: 1, 8, 128>}]} {
    %c0_i32 = arith.constant 0 : i32
    %0 = arith.cmpi eq, %arg0, %c0_i32 : i32
    %1 = arith.extui %0 : i1 to i32
    %c0_i32_0 = arith.constant 0 : i32
    %2 = arith.cmpi ne, %1, %c0_i32_0 : i32
    scf.if %2 {
      %c0_16 = arith.constant 0 : index
      %c0_17 = arith.constant 0 : index
      %47 = vector.load %arg2[%c0_16, %c0_17] : memref<8x128xf32, #tpu.memory_space<vmem>>, vector<8x128xf32>
      %c0_18 = arith.constant 0 : index
      %c0_19 = arith.constant 0 : index
      %48 = vector.load %arg6[%c0_18, %c0_19] : memref<8x128xf32, #tpu.memory_space<vmem>>, vector<8x128xf32>
      tpu.vector_store %arg6[%c0_18, %c0_19], %47 {strides = array<i32>} : memref<8x128xf32, #tpu.memory_space<vmem>>, vector<8x128xf32>,
    } else {
    }
    %c0 = arith.constant 0 : index
    %c0_1 = arith.constant 0 : index
    %3 = vector.load %arg4[%c0, %c0_1] : memref<1x384xf32, #tpu.memory_space<vmem>>, vector<1x384xf32>
    %4 = vector.shape_cast %3 : vector<1x384xf32> to vector<1x384xf32>
    %5 = vector.broadcast %4 : vector<1x384xf32> to vector<8x384xf32>
    %c0_2 = arith.constant 0 : index
    %c0_3 = arith.constant 0 : index
    %6 = vector.load %arg6[%c0_2, %c0_3] : memref<8x128xf32, #tpu.memory_space<vmem>>, vector<8x128xf32>
    %c0_i32_4 = arith.constant 0 : i32
    %7 = arith.index_cast %c0_i32_4 : i32 to index
    %c0_5 = arith.constant 0 : index
    %c0_6 = arith.constant 0 : index
    %8 = vector.load %arg1[%7, %c0_5, %c0_6] : memref<1x8x512xf32, #tpu.memory_space<vmem>>, vector<1x8x512xf32>
    %9 = vector.shape_cast %8 : vector<1x8x512xf32> to vector<8x512xf32>
    %10 = vector.extract_strided_slice %9 {offsets = [0, 0], sizes = [8, 384], strides = [1, 1]} : vector<8x512xf32> to vector<8x384xf32>
    %11 = vector.extract_strided_slice %9 {offsets = [0, 384], sizes = [8, 128], strides = [1, 1]} : vector<8x512xf32> to vector<8x128xf32>
    %12 = arith.mulf %11, %6 : vector<8x128xf32>
    %c0_7 = arith.constant 0 : index
    %c0_8 = arith.constant 0 : index
    %13 = vector.load %arg3[%c0_7, %c0_8] : memref<128x384xf32, #tpu.memory_space<vmem>>, vector<128x384xf32>
    %cst = arith.constant dense<0.000000e+00> : vector<8x384xf32>
    %14 = tpu.matmul %12, %13, %cst {dimension_numbers = #tpu.dot_dimension_numbers<[1], [0], [0], [1], [0, 0, 1, 1], [], []>} : vector<8x128xf32>, vector<128x384xf32>, vector<8x384xf32> -> vector<8x384xf32>
    %15 = arith.addf %14, %5 : vector<8x384xf32>
    %16 = vector.extract_strided_slice %10 {offsets = [0, 0], sizes = [8, 128], strides = [1, 1]} : vector<8x384xf32> to vector<8x128xf32>
    %17 = vector.extract_strided_slice %15 {offsets = [0, 0], sizes = [8, 128], strides = [1, 1]} : vector<8x384xf32> to vector<8x128xf32>
    %18 = arith.addf %16, %17 : vector<8x128xf32>
    %19 = arith.negf %18 : vector<8x128xf32>
    %20 = math.exp %19 : vector<8x128xf32>
    %cst_9 = arith.constant 1.000000e+00 : f32
    %21 = vector.broadcast %cst_9 : f32 to vector<8x128xf32>
    %22 = arith.addf %21, %20 : vector<8x128xf32>
    %23 = arith.divf %21, %22 : vector<8x128xf32>
    %24 = vector.extract_strided_slice %10 {offsets = [0, 128], sizes = [8, 128], strides = [1, 1]} : vector<8x384xf32> to vector<8x128xf32>
    %25 = vector.extract_strided_slice %15 {offsets = [0, 128], sizes = [8, 128], strides = [1, 1]} : vector<8x384xf32> to vector<8x128xf32>
    %26 = arith.addf %24, %25 : vector<8x128xf32>
    %27 = arith.negf %26 : vector<8x128xf32>
    %28 = math.exp %27 : vector<8x128xf32>
    %cst_10 = arith.constant 1.000000e+00 : f32
    %29 = vector.broadcast %cst_10 : f32 to vector<8x128xf32>
    %30 = arith.addf %29, %28 : vector<8x128xf32>
    %31 = arith.divf %29, %30 : vector<8x128xf32>
    %32 = vector.extract_strided_slice %10 {offsets = [0, 256], sizes = [8, 128], strides = [1, 1]} : vector<8x384xf32> to vector<8x128xf32>
    %33 = vector.extract_strided_slice %15 {offsets = [0, 256], sizes = [8, 128], strides = [1, 1]} : vector<8x384xf32> to vector<8x128xf32>
    %34 = arith.mulf %23, %33 : vector<8x128xf32>
    %35 = arith.addf %32, %34 : vector<8x128xf32>
    %36 = math.tanh %35 : vector<8x128xf32>
    %cst_11 = arith.constant 1.000000e+00 : f32
    %37 = vector.broadcast %cst_11 : f32 to vector<8x128xf32>
    %38 = arith.subf %37, %31 : vector<8x128xf32>
    %39 = arith.mulf %38, %36 : vector<8x128xf32>
    %40 = arith.mulf %31, %12 : vector<8x128xf32>
    %41 = arith.addf %39, %40 : vector<8x128xf32>
    %42 = arith.index_cast %c0_i32_4 : i32 to index
    %c0_12 = arith.constant 0 : index
    %c0_13 = arith.constant 0 : index
    %43 = vector.load %arg5[%42, %c0_12, %c0_13] : memref<1x8x128xf32, #tpu.memory_space<vmem>>, vector<1x8x128xf32>
    %44 = vector.shape_cast %43 : vector<1x8x128xf32> to vector<8x128xf32>
    %45 = vector.shape_cast %41 : vector<8x128xf32> to vector<1x8x128xf32>
    tpu.vector_store %arg5[%42, %c0_12, %c0_13], %45 {strides = array<i32>} : memref<1x8x128xf32, #tpu.memory_space<vmem>>, vector<1x8x128xf32>,
    %c1_i32 = arith.constant 1 : i32
    %c0_14 = arith.constant 0 : index
    %c0_15 = arith.constant 0 : index
    %46 = vector.load %arg6[%c0_14, %c0_15] : memref<8x128xf32, #tpu.memory_space<vmem>>, vector<8x128xf32>
    tpu.vector_store %arg6[%c0_14, %c0_15], %41 {strides = array<i32>} : memref<8x128xf32, #tpu.memory_space<vmem>>, vector<8x128xf32>,
    return
  }
  func.func @transform_0(%arg0: i32) -> (i32, i32, i32) {
    %c0_i32 = arith.constant 0 : i32
    %c0_i32_0 = arith.constant 0 : i32
    %c0_i32_1 = arith.constant 0 : i32
    return %arg0, %c0_i32, %c0_i32_0 : i32, i32, i32
  }
  func.func @transform_1(%arg0: i32) -> (i32, i32) {
    %c0_i32 = arith.constant 0 : i32
    %c0_i32_0 = arith.constant 0 : i32
    %c0_i32_1 = arith.constant 0 : i32
    return %c0_i32, %c0_i32_0 : i32, i32
  }
  func.func @transform_2(%arg0: i32) -> (i32, i32) {
    %c0_i32 = arith.constant 0 : i32
    %c0_i32_0 = arith.constant 0 : i32
    %c0_i32_1 = arith.constant 0 : i32
    return %c0_i32, %c0_i32_0 : i32, i32
  }
  func.func @transform_3(%arg0: i32) -> (i32, i32) {
    %c0_i32 = arith.constant 0 : i32
    %c0_i32_0 = arith.constant 0 : i32
    %c0_i32_1 = arith.constant 0 : i32
    return %c0_i32, %c0_i32_0 : i32, i32
  }
  func.func @transform_4(%arg0: i32) -> (i32, i32, i32) {
    %c0_i32 = arith.constant 0 : i32
    %c0_i32_0 = arith.constant 0 : i32
    %c0_i32_1 = arith.constant 0 : i32
    return %arg0, %c0_i32, %c0_i32_0 : i32, i32, i32
  }
}

module attributes {stable_mosaic.version = 11 : i64} {
  func.func @grud_output_kernel(%arg0: i32, %arg1: memref<8x128xf32, #tpu.memory_space<vmem>>, %arg2: memref<128x128xf32, #tpu.memory_space<vmem>>, %arg3: memref<1x128xf32, #tpu.memory_space<vmem>>, %arg4: memref<8x128xf32, #tpu.memory_space<vmem>>) attributes {dimension_semantics = [#tpu.dimension_semantics<parallel>], iteration_bounds = array<i64: 1>, scalar_prefetch = 0 : i64, scratch_operands = 0 : i64, tpu.core_type = #tpu.core_type<tc>, window_params = [{transform_indices = @transform_0, window_bounds = array<i64: 8, 128>}, {pipeline_mode = #tpu.pipeline_mode<synchronous>, transform_indices = @transform_1, window_bounds = array<i64: 128, 128>}, {pipeline_mode = #tpu.pipeline_mode<synchronous>, transform_indices = @transform_2, window_bounds = array<i64: 1, 128>}, {transform_indices = @transform_3, window_bounds = array<i64: 8, 128>}]} {
    %c0 = arith.constant 0 : index
    %c0_0 = arith.constant 0 : index
    %0 = vector.load %arg1[%c0, %c0_0] : memref<8x128xf32, #tpu.memory_space<vmem>>, vector<8x128xf32>
    %c0_1 = arith.constant 0 : index
    %c0_2 = arith.constant 0 : index
    %1 = vector.load %arg2[%c0_1, %c0_2] : memref<128x128xf32, #tpu.memory_space<vmem>>, vector<128x128xf32>
    %cst = arith.constant dense<0.000000e+00> : vector<8x128xf32>
    %2 = tpu.matmul %0, %1, %cst {dimension_numbers = #tpu.dot_dimension_numbers<[1], [0], [0], [1], [0, 0, 1, 1], [], []>} : vector<8x128xf32>, vector<128x128xf32>, vector<8x128xf32> -> vector<8x128xf32>
    %c0_3 = arith.constant 0 : index
    %c0_4 = arith.constant 0 : index
    %3 = vector.load %arg3[%c0_3, %c0_4] : memref<1x128xf32, #tpu.memory_space<vmem>>, vector<1x128xf32>
    %4 = vector.broadcast %3 : vector<1x128xf32> to vector<8x128xf32>
    %5 = arith.addf %2, %4 : vector<8x128xf32>
    %cst_5 = arith.constant 0.000000e+00 : f32
    %6 = vector.broadcast %cst_5 : f32 to vector<8x128xf32>
    %7 = arith.maximumf %5, %6 : vector<8x128xf32>
    %8 = math.absf %5 : vector<8x128xf32>
    %cst_6 = arith.constant 0.000000e+00 : f32
    %9 = vector.broadcast %cst_6 : f32 to vector<8x128xf32>
    %10 = arith.subf %9, %8 : vector<8x128xf32>
    %11 = math.exp %10 : vector<8x128xf32>
    %cst_7 = arith.constant 1.000000e+00 : f32
    %12 = vector.broadcast %cst_7 : f32 to vector<8x128xf32>
    %13 = arith.addf %12, %11 : vector<8x128xf32>
    %14 = math.log %13 : vector<8x128xf32>
    %15 = arith.addf %7, %14 : vector<8x128xf32>
    %c0_8 = arith.constant 0 : index
    %c0_9 = arith.constant 0 : index
    %16 = vector.load %arg4[%c0_8, %c0_9] : memref<8x128xf32, #tpu.memory_space<vmem>>, vector<8x128xf32>
    tpu.vector_store %arg4[%c0_8, %c0_9], %15 {strides = array<i32>} : memref<8x128xf32, #tpu.memory_space<vmem>>, vector<8x128xf32>,
    return
  }
  func.func @transform_0(%arg0: i32) -> (i32, i32) {
    %c0_i32 = arith.constant 0 : i32
    %c0_i32_0 = arith.constant 0 : i32
    return %arg0, %c0_i32 : i32, i32
  }
  func.func @transform_1(%arg0: i32) -> (i32, i32) {
    %c0_i32 = arith.constant 0 : i32
    %c0_i32_0 = arith.constant 0 : i32
    %c0_i32_1 = arith.constant 0 : i32
    return %c0_i32, %c0_i32_0 : i32, i32
  }
  func.func @transform_2(%arg0: i32) -> (i32, i32) {
    %c0_i32 = arith.constant 0 : i32
    %c0_i32_0 = arith.constant 0 : i32
    %c0_i32_1 = arith.constant 0 : i32
    return %c0_i32, %c0_i32_0 : i32, i32
  }
  func.func @transform_3(%arg0: i32) -> (i32, i32) {
    %c0_i32 = arith.constant 0 : i32
    %c0_i32_0 = arith.constant 0 : i32
    return %arg0, %c0_i32 : i32, i32
  }
}

</mosaic_0001>

<llo_original>
// kernel: grud_forward_sequence.5
$region0: #{grud_forward_sequence.5}
  #allocation0 [shape = 'u32[]', space=smem, size = 0x4, offset = 0x4, fixed_abs, tag = 'smem constant byte address 0x4 - core index']
  #allocation1 [shape = 'u32[144,128]{1,0:T(1,128)}', space=vmem, size = 0x12000, scoped, tag = 'internal scratch']
  %s0 = inlined_call_operand.vmem [shape: f32[8,128], index: 0, kind: input, shape index: {}]
  %s1 = inlined_call_operand.vmem [shape: f32[128,128], index: 1, kind: input, shape index: {}]
  %s2 = inlined_call_operand.vmem [shape: f32[1,128], index: 2, kind: input, shape index: {}]
  %s3 = inlined_call_operand.vmem [shape: f32[8,128], index: 3, kind: output, shape index: {}]
  %s4 = sld [smem:[#allocation0]]
  $region22: #{grud_forward_sequence.5} parent=0
    _
  %s6 = ssub.s32 1, %s4
  %s7 = scalar_select 0, %s6, %s4
  // Predicated region
  $region2: #{grud_forward_sequence.5} parent=0 // pred_check
    _
  $region3: #{grud_forward_sequence.5} parent=0 // pred_check_branch
    %9 = sbr.rel (0) target = $region5
  $region4: #{grud_forward_sequence.5} parent=0 // pred_region
    _
  $region5: #{grud_forward_sequence.5} parent=0 // pred_fallthru
    _
  // Predicated region
  $region6: #{grud_forward_sequence.5} parent=0 // pred_check
    _
  $region7: #{grud_forward_sequence.5} parent=0 // pred_check_branch
    %11 = sbr.rel (0) target = $region9
  $region8: #{grud_forward_sequence.5} parent=0 // pred_region
    _
  $region9: #{grud_forward_sequence.5} parent=0 // pred_fallthru
    _
  // Predicated region
  $region10: #{grud_forward_sequence.5} parent=0 // pred_check
    _
  $region11: #{grud_forward_sequence.5} parent=0 // pred_check_branch
    %13 = sbr.rel (0) target = $region13
  $region12: #{grud_forward_sequence.5} parent=0 // pred_region
    _
  $region13: #{grud_forward_sequence.5} parent=0 // pred_fallthru
    _
  %v14 = vld [vmem:[%s0] sm:$0xff]
  %v15 = vld [vmem:[%s1] sm:$0xff]
  %v16 = vld [vmem:[%s1 + $0x8] sm:$0xff]
  %v17 = vld [vmem:[%s1 + $0x10] sm:$0xff]
  %v18 = vld [vmem:[%s1 + $0x18] sm:$0xff]
  %v19 = vld [vmem:[%s1 + $0x20] sm:$0xff]
  %v20 = vld [vmem:[%s1 + $0x28] sm:$0xff]
  %v21 = vld [vmem:[%s1 + $0x30] sm:$0xff]
  %v22 = vld [vmem:[%s1 + $0x38] sm:$0xff]
  %v23 = vld [vmem:[%s1 + $0x40] sm:$0xff]
  %v24 = vld [vmem:[%s1 + $0x48] sm:$0xff]
  %v25 = vld [vmem:[%s1 + $0x50] sm:$0xff]
  %v26 = vld [vmem:[%s1 + $0x58] sm:$0xff]
  %v27 = vld [vmem:[%s1 + $0x60] sm:$0xff]
  %v28 = vld [vmem:[%s1 + $0x68] sm:$0xff]
  %v29 = vld [vmem:[%s1 + $0x70] sm:$0xff]
  %v30 = vld [vmem:[%s1 + $0x78] sm:$0xff]
  %v31 = vld [vmem:[%s2] sm:$0x1]
  %v33 = vlaneseq
  %v34 = vshrl.u32 %v33, 7
  %v35 = vsub.s32 0, %v34
  %v36 = vrot.slane %v31, %v35
  %38 = vmatprep.subr.mxu0 0.0
  %39 = vmatpush1.msra.mxu0 %v15
  %40 = vmatprep.subr.mxu0 0.0
  %41 = vmatpush1.msra.mxu0 %v16
  %42 = vmatprep.subr.mxu0 0.0
  %43 = vmatpush1.msra.mxu0 %v17
  %44 = vmatprep.subr.mxu0 0.0
  %45 = vmatpush1.msra.mxu0 %v18
  %46 = vmatprep.subr.mxu0 0.0
  %47 = vmatpush1.msra.mxu0 %v19
  %48 = vmatprep.subr.mxu0 0.0
  %49 = vmatpush1.msra.mxu0 %v20
  %50 = vmatprep.subr.mxu0 0.0
  %51 = vmatpush1.msra.mxu0 %v21
  %52 = vmatprep.subr.mxu0 0.0
  %53 = vmatpush1.msra.mxu0 %v22
  %54 = vmatprep.subr.mxu0 0.0
  %55 = vmatpush1.msra.mxu0 %v23
  %56 = vmatprep.subr.mxu0 0.0
  %57 = vmatpush1.msra.mxu0 %v24
  %58 = vmatprep.subr.mxu0 0.0
  %59 = vmatpush1.msra.mxu0 %v25
  %60 = vmatprep.subr.mxu0 0.0
  %61 = vmatpush1.msra.mxu0 %v26
  %62 = vmatprep.subr.mxu0 0.0
  %63 = vmatpush1.msra.mxu0 %v27
  %64 = vmatprep.subr.mxu0 0.0
  %65 = vmatpush1.msra.mxu0 %v28
  %66 = vmatprep.subr.mxu0 0.0
  %67 = vmatpush1.msra.mxu0 %v29
  %68 = vmatprep.subr.mxu0 0.0
  %69 = vmatpush1.msra.mxu0 %v30
  %70 = vmatprep.subr.mxu0 0.0
  %71 = vmatpush1.msra.mxu0 0.0
  %72 = vmatprep.subr.mxu0 0.0
  %73 = vmatpush1.msra.mxu0 0.0
  %74 = vmatprep.subr.mxu0 0.0
  %75 = vmatpush1.msra.mxu0 0.0
  %76 = vmatprep.subr.mxu0 0.0
  %77 = vmatpush1.msra.mxu0 0.0
  %78 = vmatprep.subr.mxu0 0.0
  %79 = vmatpush1.msra.mxu0 0.0
  %80 = vmatprep.subr.mxu0 0.0
  %81 = vmatpush1.msra.mxu0 0.0
  %82 = vmatprep.subr.mxu0 0.0
  %83 = vmatpush1.msra.mxu0 0.0
  %84 = vmatprep.subr.mxu0 0.0
  %85 = vmatpush1.msra.mxu0 0.0
  %86 = vmatprep.subr.mxu0 0.0
  %87 = vmatpush1.msra.mxu0 0.0
  %88 = vmatprep.subr.mxu0 0.0
  %89 = vmatpush1.msra.mxu0 0.0
  %90 = vmatprep.subr.mxu0 0.0
  %91 = vmatpush1.msra.mxu0 0.0
  %92 = vmatprep.subr.mxu0 0.0
  %93 = vmatpush1.msra.mxu0 0.0
  %94 = vmatprep.subr.mxu0 0.0
  %95 = vmatpush1.msra.mxu0 0.0
  %96 = vmatprep.subr.mxu0 0.0
  %97 = vmatpush1.msra.mxu0 0.0
  %98 = vmatprep.subr.mxu0 0.0
  %99 = vmatpush1.msra.mxu0 0.0
  %100 = vmatprep.subr.mxu0 0.0
  %101 = vmatpush1.msra.mxu0 0.0
  %102 = vmatprep.mubr.f32.mxu0 0.0
  %103 = vmatmul.mubr.f32.gmra.mrb[0].mxu0 %v14
  %v104 = vpop.f32.mrb[0].mxu0
  %v105 = vadd.f32 %v36, %v104
  %v106 = vpop.f32.mrb[0].mxu0
  %107 = vdwg.mxu0
  %v108 = vmax.f32 %v105, 0.0
  %v109 = vand.u32 2147483647, %v105
  %v110 = vsub.f32 0.0, %v109
  %v111 = vmul.f32 %v110, 1.442695
  %v112 = vpow.pop %v111
  %v113 = vadd.f32 %v112, 1.0
  %v114 = vlog2.pop %v113
  %v115 = vmul.f32 %v114, 0.6931472
  %v116 = vadd.f32 %v108, %v115
  %117 = vst [vmem:[%s3] sm:$0xff] %v116
  // Predicated region
  $region14: #{grud_forward_sequence.5} parent=0 // pred_check
    _
  $region15: #{grud_forward_sequence.5} parent=0 // pred_check_branch
    %119 = sbr.rel (0) target = $region17
  $region16: #{grud_forward_sequence.5} parent=0 // pred_region
    _
  $region17: #{grud_forward_sequence.5} parent=0 // pred_fallthru
    _
  // Predicated region
  $region18: #{grud_forward_sequence.5} parent=0 // pred_check
    _
  $region19: #{grud_forward_sequence.5} parent=0 // pred_check_branch
    %121 = sbr.rel (0) target = $region21
  $region20: #{grud_forward_sequence.5} parent=0 // pred_region
    _
  $region21: #{grud_forward_sequence.5} parent=0 // pred_fallthru
    _

// kernel: grud_forward_sequence.4
$region0: #{grud_forward_sequence.4}
  #allocation0 [shape = 'u32[]', space=smem, size = 0x4, offset = 0x4, fixed_abs, tag = 'smem constant byte address 0x4 - core index']
  #allocation1 [shape = 'u32[144,128]{1,0:T(1,128)}', space=vmem, size = 0x12000, scoped, tag = 'internal scratch']
  #allocation2 [shape = 'f32[8,128]{1,0:T(8,128)}', space=vmem, size = 0x1000, scoped, tag = 'scratch operand']
  %s0 = inlined_call_operand.vmem [shape: f32[1,8,512], index: 0, kind: input, shape index: {}]
  %s1 = inlined_call_operand.vmem [shape: f32[8,128], index: 1, kind: input, shape index: {}]
  %s2 = inlined_call_operand.vmem [shape: f32[128,384], index: 2, kind: input, shape index: {}]
  %s3 = inlined_call_operand.vmem [shape: f32[1,384], index: 3, kind: input, shape index: {}]
  %s4 = inlined_call_operand.vmem [shape: f32[1,8,128], index: 4, kind: output, shape index: {}]
  %s5 = sld [smem:[#allocation0]]
  $region30: #{grud_forward_sequence.4} parent=0
    _
  %s7 = ssub.s32 1, %s5
  %s8 = scalar_select 0, %s7, %s5
  // Predicated region
  $region2: #{grud_forward_sequence.4} parent=0 // pred_check
    _
  $region3: #{grud_forward_sequence.4} parent=0 // pred_check_branch
    %10 = sbr.rel (0) target = $region5
  $region4: #{grud_forward_sequence.4} parent=0 // pred_region
    _
  $region5: #{grud_forward_sequence.4} parent=0 // pred_fallthru
    _
  // Predicated region
  $region6: #{grud_forward_sequence.4} parent=0 // pred_check
    _
  $region7: #{grud_forward_sequence.4} parent=0 // pred_check_branch
    %12 = sbr.rel (0) target = $region9
  $region8: #{grud_forward_sequence.4} parent=0 // pred_region
    _
  $region9: #{grud_forward_sequence.4} parent=0 // pred_fallthru
    _
  // Predicated region
  $region10: #{grud_forward_sequence.4} parent=0 // pred_check
    _
  $region11: #{grud_forward_sequence.4} parent=0 // pred_check_branch
    %14 = sbr.rel (0) target = $region13
  $region12: #{grud_forward_sequence.4} parent=0 // pred_region
    _
  $region13: #{grud_forward_sequence.4} parent=0 // pred_fallthru
    _
  // Predicated region
  $region14: #{grud_forward_sequence.4} parent=0 // pred_check
    _
  $region15: #{grud_forward_sequence.4} parent=0 // pred_check_branch
    %16 = sbr.rel (0) target = $region17
  $region16: #{grud_forward_sequence.4} parent=0 // pred_region
    _
  $region17: #{grud_forward_sequence.4} parent=0 // pred_fallthru
    _
  %p17 = scmp.eq.s32.totalorder 0, 0
  // Predicated region
  $region18: #{grud_forward_sequence.4} parent=0 // pred_check
    %p18 = pneg %p17
  $region19: #{grud_forward_sequence.4} parent=0 // pred_check_branch
    %20 = sbr.rel (%p18) target = $region21
  $region20: #{grud_forward_sequence.4} parent=0 // pred_region
    %v21 = vld [vmem:[%s1] sm:$0xff]
    %22 = vst [vmem:[#allocation2] sm:$0xff] %v21
  $region21: #{grud_forward_sequence.4} parent=0 // pred_fallthru
    _
  %v23 = vld [vmem:[%s3] sm:$0x7]
  %v25 = vlaneseq
  %v26 = vshrl.u32 %v25, 7
  %v27 = vsub.s32 0, %v26
  %v28 = vrot.slane %v23, %v27
  %v29 = vlaneseq
  %v30 = vshrl.u32 %v29, 7
  %v31 = vsub.s32 1, %v30
  %v32 = vrot.slane %v23, %v31
  %v33 = vlaneseq
  %v34 = vshrl.u32 %v33, 7
  %v35 = vsub.s32 2, %v34
  %v36 = vrot.slane %v23, %v35
  %v40 = vld [vmem:[#allocation2] sm:$0xff]
  %v41 = vld [vmem:[%s0] sm:$0xff]
  %v42 = vld [vmem:[%s0 + $0x8] sm:$0xff]
  %v43 = vld [vmem:[%s0 + $0x10] sm:$0xff]
  %v44 = vld [vmem:[%s0 + $0x18] sm:$0xff]
  %v45 = vmul.f32 %v44, %v40
  %v46 = vld [vmem:[%s2] sm:$0xff]
  %v47 = vld [vmem:[%s2 + $0x8] sm:$0xff]
  %v48 = vld [vmem:[%s2 + $0x10] sm:$0xff]
  %v49 = vld [vmem:[%s2 + $0x18] sm:$0xff]
  %v50 = vld [vmem:[%s2 + $0x20] sm:$0xff]
  %v51 = vld [vmem:[%s2 + $0x28] sm:$0xff]
  %v52 = vld [vmem:[%s2 + $0x30] sm:$0xff]
  %v53 = vld [vmem:[%s2 + $0x38] sm:$0xff]
  %v54 = vld [vmem:[%s2 + $0x40] sm:$0xff]
  %v55 = vld [vmem:[%s2 + $0x48] sm:$0xff]
  %v56 = vld [vmem:[%s2 + $0x50] sm:$0xff]
  %v57 = vld [vmem:[%s2 + $0x58] sm:$0xff]
  %v58 = vld [vmem:[%s2 + $0x60] sm:$0xff]
  %v59 = vld [vmem:[%s2 + $0x68] sm:$0xff]
  %v60 = vld [vmem:[%s2 + $0x70] sm:$0xff]
  %v61 = vld [vmem:[%s2 + $0x78] sm:$0xff]
  %v62 = vld [vmem:[%s2 + $0x80] sm:$0xff]
  %v63 = vld [vmem:[%s2 + $0x88] sm:$0xff]
  %v64 = vld [vmem:[%s2 + $0x90] sm:$0xff]
  %v65 = vld [vmem:[%s2 + $0x98] sm:$0xff]
  %v66 = vld [vmem:[%s2 + $0xa0] sm:$0xff]
  %v67 = vld [vmem:[%s2 + $0xa8] sm:$0xff]
  %v68 = vld [vmem:[%s2 + $0xb0] sm:$0xff]
  %v69 = vld [vmem:[%s2 + $0xb8] sm:$0xff]
  %v70 = vld [vmem:[%s2 + $0xc0] sm:$0xff]
  %v71 = vld [vmem:[%s2 + $0xc8] sm:$0xff]
  %v72 = vld [vmem:[%s2 + $0xd0] sm:$0xff]
  %v73 = vld [vmem:[%s2 + $0xd8] sm:$0xff]
  %v74 = vld [vmem:[%s2 + $0xe0] sm:$0xff]
  %v75 = vld [vmem:[%s2 + $0xe8] sm:$0xff]
  %v76 = vld [vmem:[%s2 + $0xf0] sm:$0xff]
  %v77 = vld [vmem:[%s2 + $0xf8] sm:$0xff]
  %v78 = vld [vmem:[%s2 + $0x100] sm:$0xff]
  %v79 = vld [vmem:[%s2 + $0x108] sm:$0xff]
  %v80 = vld [vmem:[%s2 + $0x110] sm:$0xff]
  %v81 = vld [vmem:[%s2 + $0x118] sm:$0xff]
  %v82 = vld [vmem:[%s2 + $0x120] sm:$0xff]
  %v83 = vld [vmem:[%s2 + $0x128] sm:$0xff]
  %v84 = vld [vmem:[%s2 + $0x130] sm:$0xff]
  %v85 = vld [vmem:[%s2 + $0x138] sm:$0xff]
  %v86 = vld [vmem:[%s2 + $0x140] sm:$0xff]
  %v87 = vld [vmem:[%s2 + $0x148] sm:$0xff]
  %v88 = vld [vmem:[%s2 + $0x150] sm:$0xff]
  %v89 = vld [vmem:[%s2 + $0x158] sm:$0xff]
  %v90 = vld [vmem:[%s2 + $0x160] sm:$0xff]
  %v91 = vld [vmem:[%s2 + $0x168] sm:$0xff]
  %v92 = vld [vmem:[%s2 + $0x170] sm:$0xff]
  %v93 = vld [vmem:[%s2 + $0x178] sm:$0xff]
  %94 = vmatprep.subr.mxu0 %v47
  %95 = vmatpush1.msra.mxu0 %v46
  %96 = vmatprep.subr.mxu0 %v50
  %97 = vmatpush1.msra.mxu0 %v49
  %98 = vmatprep.subr.mxu0 %v53
  %99 = vmatpush1.msra.mxu0 %v52
  %100 = vmatprep.subr.mxu0 %v56
  %101 = vmatpush1.msra.mxu0 %v55
  %102 = vmatprep.subr.mxu0 %v59
  %103 = vmatpush1.msra.mxu0 %v58
  %104 = vmatprep.subr.mxu0 %v62
  %105 = vmatpush1.msra.mxu0 %v61
  %106 = vmatprep.subr.mxu0 %v65
  %107 = vmatpush1.msra.mxu0 %v64
  %108 = vmatprep.subr.mxu0 %v68
  %109 = vmatpush1.msra.mxu0 %v67
  %110 = vmatprep.subr.mxu0 %v71
  %111 = vmatpush1.msra.mxu0 %v70
  %112 = vmatprep.subr.mxu0 %v74
  %113 = vmatpush1.msra.mxu0 %v73
  %114 = vmatprep.subr.mxu0 %v77
  %115 = vmatpush1.msra.mxu0 %v76
  %116 = vmatprep.subr.mxu0 %v80
  %117 = vmatpush1.msra.mxu0 %v79
  %118 = vmatprep.subr.mxu0 %v83
  %119 = vmatpush1.msra.mxu0 %v82
  %120 = vmatprep.subr.mxu0 %v86
  %121 = vmatpush1.msra.mxu0 %v85
  %122 = vmatprep.subr.mxu0 %v89
  %123 = vmatpush1.msra.mxu0 %v88
  %124 = vmatprep.subr.mxu0 %v92
  %125 = vmatpush1.msra.mxu0 %v91
  %126 = vmatprep.subr.mxu0 0.0
  %127 = vmatpush1.msra.mxu0 0.0
  %128 = vmatprep.subr.mxu0 0.0
  %129 = vmatpush1.msra.mxu0 0.0
  %130 = vmatprep.subr.mxu0 0.0
  %131 = vmatpush1.msra.mxu0 0.0
  %132 = vmatprep.subr.mxu0 0.0
  %133 = vmatpush1.msra.mxu0 0.0
  %134 = vmatprep.subr.mxu0 0.0
  %135 = vmatpush1.msra.mxu0 0.0
  %136 = vmatprep.subr.mxu0 0.0
  %137 = vmatpush1.msra.mxu0 0.0
  %138 = vmatprep.subr.mxu0 0.0
  %139 = vmatpush1.msra.mxu0 0.0
  %140 = vmatprep.subr.mxu0 0.0
  %141 = vmatpush1.msra.mxu0 0.0
  %142 = vmatprep.subr.mxu0 0.0
  %143 = vmatpush1.msra.mxu0 0.0
  %144 = vmatprep.subr.mxu0 0.0
  %145 = vmatpush1.msra.mxu0 0.0
  %146 = vmatprep.subr.mxu0 0.0
  %147 = vmatpush1.msra.mxu0 0.0
  %148 = vmatprep.subr.mxu0 0.0
  %149 = vmatpush1.msra.mxu0 0.0
  %150 = vmatprep.subr.mxu0 0.0
  %151 = vmatpush1.msra.mxu0 0.0
  %152 = vmatprep.subr.mxu0 0.0
  %153 = vmatpush1.msra.mxu0 0.0
  %154 = vmatprep.subr.mxu0 0.0
  %155 = vmatpush1.msra.mxu0 0.0
  %156 = vmatprep.subr.mxu0 0.0
  %157 = vmatpush1.msra.mxu0 0.0
  %158 = vmatprep.mubr.f32.mxu0 0.0
  %159 = vmatmul.mubr.f32.gmra.mrb[0].mxu0 %v45
  %v160 = vpop.f32.mrb[0].mxu0
  %v161 = vadd.f32 %v28, %v160
  %v162 = vpop.f32.mrb[0].mxu0
  %v163 = vadd.f32 %v32, %v162
  %164 = vdwg.mxu0
  %165 = vmatprep.subr.mxu0 0.0
  %166 = vmatpush1.msra.mxu0 %v48
  %167 = vmatprep.subr.mxu0 0.0
  %168 = vmatpush1.msra.mxu0 %v51
  %169 = vmatprep.subr.mxu0 0.0
  %170 = vmatpush1.msra.mxu0 %v54
  %171 = vmatprep.subr.mxu0 0.0
  %172 = vmatpush1.msra.mxu0 %v57
  %173 = vmatprep.subr.mxu0 0.0
  %174 = vmatpush1.msra.mxu0 %v60
  %175 = vmatprep.subr.mxu0 0.0
  %176 = vmatpush1.msra.mxu0 %v63
  %177 = vmatprep.subr.mxu0 0.0
  %178 = vmatpush1.msra.mxu0 %v66
  %179 = vmatprep.subr.mxu0 0.0
  %180 = vmatpush1.msra.mxu0 %v69
  %181 = vmatprep.subr.mxu0 0.0
  %182 = vmatpush1.msra.mxu0 %v72
  %183 = vmatprep.subr.mxu0 0.0
  %184 = vmatpush1.msra.mxu0 %v75
  %185 = vmatprep.subr.mxu0 0.0
  %186 = vmatpush1.msra.mxu0 %v78
  %187 = vmatprep.subr.mxu0 0.0
  %188 = vmatpush1.msra.mxu0 %v81
  %189 = vmatprep.subr.mxu0 0.0
  %190 = vmatpush1.msra.mxu0 %v84
  %191 = vmatprep.subr.mxu0 0.0
  %192 = vmatpush1.msra.mxu0 %v87
  %193 = vmatprep.subr.mxu0 0.0
  %194 = vmatpush1.msra.mxu0 %v90
  %195 = vmatprep.subr.mxu0 0.0
  %196 = vmatpush1.msra.mxu0 %v93
  %197 = vmatprep.subr.mxu0 0.0
  %198 = vmatpush1.msra.mxu0 0.0
  %199 = vmatprep.subr.mxu0 0.0
  %200 = vmatpush1.msra.mxu0 0.0
  %201 = vmatprep.subr.mxu0 0.0
  %202 = vmatpush1.msra.mxu0 0.0
  %203 = vmatprep.subr.mxu0 0.0
  %204 = vmatpush1.msra.mxu0 0.0
  %205 = vmatprep.subr.mxu0 0.0
  %206 = vmatpush1.msra.mxu0 0.0
  %207 = vmatprep.subr.mxu0 0.0
  %208 = vmatpush1.msra.mxu0 0.0
  %209 = vmatprep.subr.mxu0 0.0
  %210 = vmatpush1.msra.mxu0 0.0
  %211 = vmatprep.subr.mxu0 0.0
  %212 = vmatpush1.msra.mxu0 0.0
  %213 = vmatprep.subr.mxu0 0.0
  %214 = vmatpush1.msra.mxu0 0.0
  %215 = vmatprep.subr.mxu0 0.0
  %216 = vmatpush1.msra.mxu0 0.0
  %217 = vmatprep.subr.mxu0 0.0
  %218 = vmatpush1.msra.mxu0 0.0
  %219 = vmatprep.subr.mxu0 0.0
  %220 = vmatpush1.msra.mxu0 0.0
  %221 = vmatprep.subr.mxu0 0.0
  %222 = vmatpush1.msra.mxu0 0.0
  %223 = vmatprep.subr.mxu0 0.0
  %224 = vmatpush1.msra.mxu0 0.0
  %225 = vmatprep.subr.mxu0 0.0
  %226 = vmatpush1.msra.mxu0 0.0
  %227 = vmatprep.subr.mxu0 0.0
  %228 = vmatpush1.msra.mxu0 0.0
  %229 = vmatprep.mubr.f32.mxu0 0.0
  %230 = vmatmul.mubr.f32.gmra.mrb[0].mxu0 %v45
  %v231 = vpop.f32.mrb[0].mxu0
  %v232 = vadd.f32 %v36, %v231
  %v233 = vpop.f32.mrb[0].mxu0
  %234 = vdwg.mxu0
  %v235 = vadd.f32 %v41, %v161
  %v236 = vxor.u32 %v235, 2147483648
  %v237 = vmul.f32 %v236, 1.442695
  %v238 = vpow.pop %v237
  %v239 = vadd.f32 %v238, 1.0
  %v240 = vrcp.pop %v239
  %v241 = vmul.f32 1.0, %v240
  %v242 = vadd.f32 %v42, %v163
  %v243 = vxor.u32 %v242, 2147483648
  %v244 = vmul.f32 %v243, 1.442695
  %v245 = vpow.pop %v244
  %v246 = vadd.f32 %v245, 1.0
  %v247 = vrcp.pop %v246
  %v248 = vmul.f32 1.0, %v247
  %v249 = vmul.f32 %v241, %v232
  %v250 = vadd.f32 %v43, %v249
  %v251 = vtanh.pop %v250
  %v252 = vsub.f32 1.0, %v248
  %v253 = vmul.f32 %v252, %v251
  %v254 = vmul.f32 %v248, %v45
  %v255 = vadd.f32 %v253, %v254
  %256 = vst [vmem:[%s4] sm:$0xff] %v255
  %257 = vst [vmem:[#allocation2] sm:$0xff] %v255
  // Predicated region
  $region22: #{grud_forward_sequence.4} parent=0 // pred_check
    _
  $region23: #{grud_forward_sequence.4} parent=0 // pred_check_branch
    %259 = sbr.rel (0) target = $region25
  $region24: #{grud_forward_sequence.4} parent=0 // pred_region
    _
  $region25: #{grud_forward_sequence.4} parent=0 // pred_fallthru
    _
  // Predicated region
  $region26: #{grud_forward_sequence.4} parent=0 // pred_check
    _
  $region27: #{grud_forward_sequence.4} parent=0 // pred_check_branch
    %261 = sbr.rel (0) target = $region29
  $region28: #{grud_forward_sequence.4} parent=0 // pred_region
    _
  $region29: #{grud_forward_sequence.4} parent=0 // pred_fallthru
    _

// kernel: grud_forward_sequence.3
$region0: #{grud_forward_sequence.3}
  #allocation0 [shape = 'u32[]', space=smem, size = 0x4, offset = 0x4, fixed_abs, tag = 'smem constant byte address 0x4 - core index']
  #allocation1 [shape = 'u32[144,128]{1,0:T(1,128)}', space=vmem, size = 0x12000, scoped, tag = 'internal scratch']
  %s0 = inlined_call_operand.vmem [shape: f32[8,128], index: 0, kind: input, shape index: {}]
  %s1 = inlined_call_operand.vmem [shape: f32[8,128], index: 1, kind: input, shape index: {}]
  %s2 = inlined_call_operand.vmem [shape: f32[8,128], index: 2, kind: input, shape index: {}]
  %s3 = inlined_call_operand.vmem [shape: f32[8,128], index: 3, kind: input, shape index: {}]
  %s4 = inlined_call_operand.vmem [shape: f32[8,1], index: 4, kind: input, shape index: {}]
  %s5 = inlined_call_operand.vmem [shape: f32[2,128], index: 5, kind: input, shape index: {}]
  %s6 = inlined_call_operand.vmem [shape: f32[2,384], index: 6, kind: input, shape index: {}]
  %s7 = inlined_call_operand.hbm [shape: f32[256,128], index: 7, kind: input, shape index: {}]
  %s8 = inlined_call_operand.hbm [shape: f32[128,384], index: 8, kind: input, shape index: {}]
  %s9 = inlined_call_operand.vmem [shape: f32[8,512], index: 9, kind: output, shape index: {}]
  %s10 = sld [smem:[#allocation0]]
  $region54: #{grud_forward_sequence.3} parent=0
    _
  %s12 = ssub.s32 1, %s10
  %s13 = scalar_select 0, %s12, %s10
  $region1: #{grud_forward_sequence.3} parent=0
    #allocation2 [shape = 'u8[131072]{0}', space=vmem, size = 0x20000, scoped, tag = 'input window, operand 7, single buffered']
    #allocation3 [shape = 's32[1]{0}', space=sflag, size = 0x4, scoped, tag = 'scoped memory for grud_forward_sequence.3']
    #allocation4 [shape = 'u8[196608]{0}', space=vmem, size = 0x30000, scoped, tag = 'input window, operand 8, single buffered']
    #allocation5 [shape = 's32[1]{0}', space=sflag, size = 0x4, scoped, tag = 'scoped memory for grud_forward_sequence.3']
    %14 = vsyncpa [#allocation3], 0
    %15 = vsyncpa [#allocation5], 0
    // Predicated region
    $region2: #{grud_forward_sequence.3} parent=1 // pred_check
      _
    $region3: #{grud_forward_sequence.3} parent=1 // pred_check_branch
      %17 = sbr.rel (0) target = $region5
    $region4: #{grud_forward_sequence.3} parent=1 // pred_region
      _
    $region5: #{grud_forward_sequence.3} parent=1 // pred_fallthru
      _
    // Predicated region
    $region6: #{grud_forward_sequence.3} parent=1 // pred_check
      _
    $region7: #{grud_forward_sequence.3} parent=1 // pred_check_branch
      %19 = sbr.rel (0) target = $region9
    $region8: #{grud_forward_sequence.3} parent=1 // pred_region
      _
    $region9: #{grud_forward_sequence.3} parent=1 // pred_fallthru
      _
    // Predicated region
    $region10: #{grud_forward_sequence.3} parent=1 // pred_check
      _
    $region11: #{grud_forward_sequence.3} parent=1 // pred_check_branch
      %21 = sbr.rel (0) target = $region13
    $region12: #{grud_forward_sequence.3} parent=1 // pred_region
      _
    $region13: #{grud_forward_sequence.3} parent=1 // pred_fallthru
      _
    // Predicated region
    $region14: #{grud_forward_sequence.3} parent=1 // pred_check
      _
    $region15: #{grud_forward_sequence.3} parent=1 // pred_check_branch
      %23 = sbr.rel (0) target = $region17
    $region16: #{grud_forward_sequence.3} parent=1 // pred_region
      _
    $region17: #{grud_forward_sequence.3} parent=1 // pred_fallthru
      _
    // Predicated region
    $region18: #{grud_forward_sequence.3} parent=1 // pred_check
      _
    $region19: #{grud_forward_sequence.3} parent=1 // pred_check_branch
      %25 = sbr.rel (0) target = $region21
    $region20: #{grud_forward_sequence.3} parent=1 // pred_region
      _
    $region21: #{grud_forward_sequence.3} parent=1 // pred_fallthru
      _
    // Predicated region
    $region22: #{grud_forward_sequence.3} parent=1 // pred_check
      _
    $region23: #{grud_forward_sequence.3} parent=1 // pred_check_branch
      %27 = sbr.rel (0) target = $region25
    $region24: #{grud_forward_sequence.3} parent=1 // pred_region
      _
    $region25: #{grud_forward_sequence.3} parent=1 // pred_fallthru
      _
    // Predicated region
    $region26: #{grud_forward_sequence.3} parent=1 // pred_check
      _
    $region27: #{grud_forward_sequence.3} parent=1 // pred_check_branch
      %29 = sbr.rel (0) target = $region29
    $region28: #{grud_forward_sequence.3} parent=1 // pred_region
      _
    $region29: #{grud_forward_sequence.3} parent=1 // pred_fallthru
      _
    // Predicated region
    $region30: #{grud_forward_sequence.3} parent=1 // pred_check
      _
    $region31: #{grud_forward_sequence.3} parent=1 // pred_check_branch
      %31 = sbr.rel (0) target = $region33
    $region32: #{grud_forward_sequence.3} parent=1 // pred_region
      %s33 = ssub.s32 4096, 4096
      %34 = vsyncadd [#allocation3], %s33
      %s35 = sshll.u32 [#allocation2], 4
      %s36 = int_to_ptr.vmem [resolvable:$true] %s35
      %41 = dma.hbm_to_vmem [thread:$0]  %s7, 4096, %s36, [#allocation3], 128, 128, 8
    $region33: #{grud_forward_sequence.3} parent=1 // pred_fallthru
      _
    // Predicated region
    $region34: #{grud_forward_sequence.3} parent=1 // pred_check
      _
    $region35: #{grud_forward_sequence.3} parent=1 // pred_check_branch
      %43 = sbr.rel (0) target = $region37
    $region36: #{grud_forward_sequence.3} parent=1 // pred_region
      %s45 = ssub.s32 6144, 6144
      %46 = vsyncadd [#allocation5], %s45
      %s47 = sshll.u32 [#allocation4], 4
      %s48 = int_to_ptr.vmem [resolvable:$true] %s47
      %53 = dma.hbm_to_vmem [thread:$0]  %s8, 6144, %s48, [#allocation5], 384, 384, 24
    $region37: #{grud_forward_sequence.3} parent=1 // pred_fallthru
      _
    // Predicated region
    $region38: #{grud_forward_sequence.3} parent=1 // pred_check
      _
    $region39: #{grud_forward_sequence.3} parent=1 // pred_check_branch
      %55 = sbr.rel (0) target = $region41
    $region40: #{grud_forward_sequence.3} parent=1 // pred_region
      %56 = dma.done [#allocation3], 4096
    $region41: #{grud_forward_sequence.3} parent=1 // pred_fallthru
      _
    // Predicated region
    $region42: #{grud_forward_sequence.3} parent=1 // pred_check
      _
    $region43: #{grud_forward_sequence.3} parent=1 // pred_check_branch
      %58 = sbr.rel (0) target = $region45
    $region44: #{grud_forward_sequence.3} parent=1 // pred_region
      %59 = dma.done [#allocation5], 6144
    $region45: #{grud_forward_sequence.3} parent=1 // pred_fallthru
      _
    %v60 = vld [vmem:[%s2] sm:$0xff]
    %v61 = vld [vmem:[%s5] sm:$0x1]
    %v62 = vmax.f32 %v61, 0.0
    %v63 = vsub.f32 0.0, %v62
    %v64 = vld [vmem:[%s3] sm:$0xff]
    %v65 = vlaneseq
    %v66 = vshrl.u32 %v65, 7
    %v67 = vsub.s32 0, %v66
    %v68 = vrot.slane %v63, %v67
    %v69 = vmul.f32 %v68, %v64
    %v70 = vmul.f32 %v69, 1.442695
    %v71 = vpow.pop %v70
    %v72 = vld [vmem:[%s0] sm:$0xff]
    %v73 = vmul.f32 %v60, %v72
    %v74 = vsub.f32 1.0, %v60
    %v75 = vld [vmem:[%s1] sm:$0xff]
    %v76 = vmul.f32 %v71, %v75
    %v77 = vmul.f32 %v74, %v76
    %v78 = vadd.f32 %v73, %v77
    %v79 = vld [vmem:[#allocation2] sm:$0xff]
    %v80 = vld [vmem:[#allocation2 + $0x8] sm:$0xff]
    %v81 = vld [vmem:[#allocation2 + $0x10] sm:$0xff]
    %v82 = vld [vmem:[#allocation2 + $0x18] sm:$0xff]
    %v83 = vld [vmem:[#allocation2 + $0x20] sm:$0xff]
    %v84 = vld [vmem:[#allocation2 + $0x28] sm:$0xff]
    %v85 = vld [vmem:[#allocation2 + $0x30] sm:$0xff]
    %v86 = vld [vmem:[#allocation2 + $0x38] sm:$0xff]
    %v87 = vld [vmem:[#allocation2 + $0x40] sm:$0xff]
    %v88 = vld [vmem:[#allocation2 + $0x48] sm:$0xff]
    %v89 = vld [vmem:[#allocation2 + $0x50] sm:$0xff]
    %v90 = vld [vmem:[#allocation2 + $0x58] sm:$0xff]
    %v91 = vld [vmem:[#allocation2 + $0x60] sm:$0xff]
    %v92 = vld [vmem:[#allocation2 + $0x68] sm:$0xff]
    %v93 = vld [vmem:[#allocation2 + $0x70] sm:$0xff]
    %v94 = vld [vmem:[#allocation2 + $0x78] sm:$0xff]
    %v95 = vld [vmem:[#allocation2 + $0x80] sm:$0xff]
    %v96 = vld [vmem:[#allocation2 + $0x88] sm:$0xff]
    %v97 = vld [vmem:[#allocation2 + $0x90] sm:$0xff]
    %v98 = vld [vmem:[#allocation2 + $0x98] sm:$0xff]
    %v99 = vld [vmem:[#allocation2 + $0xa0] sm:$0xff]
    %v100 = vld [vmem:[#allocation2 + $0xa8] sm:$0xff]
    %v101 = vld [vmem:[#allocation2 + $0xb0] sm:$0xff]
    %v102 = vld [vmem:[#allocation2 + $0xb8] sm:$0xff]
    %v103 = vld [vmem:[#allocation2 + $0xc0] sm:$0xff]
    %v104 = vld [vmem:[#allocation2 + $0xc8] sm:$0xff]
    %v105 = vld [vmem:[#allocation2 + $0xd0] sm:$0xff]
    %v106 = vld [vmem:[#allocation2 + $0xd8] sm:$0xff]
    %v107 = vld [vmem:[#allocation2 + $0xe0] sm:$0xff]
    %v108 = vld [vmem:[#allocation2 + $0xe8] sm:$0xff]
    %v109 = vld [vmem:[#allocation2 + $0xf0] sm:$0xff]
    %v110 = vld [vmem:[#allocation2 + $0xf8] sm:$0xff]
    %111 = vmatprep.subr.mxu0 0.0
    %112 = vmatpush1.msra.mxu0 %v95
    %113 = vmatprep.subr.mxu0 0.0
    %114 = vmatpush1.msra.mxu0 %v96
    %115 = vmatprep.subr.mxu0 0.0
    %116 = vmatpush1.msra.mxu0 %v97
    %117 = vmatprep.subr.mxu0 0.0
    %118 = vmatpush1.msra.mxu0 %v98
    %119 = vmatprep.subr.mxu0 0.0
    %120 = vmatpush1.msra.mxu0 %v99
    %121 = vmatprep.subr.mxu0 0.0
    %122 = vmatpush1.msra.mxu0 %v100
    %123 = vmatprep.subr.mxu0 0.0
    %124 = vmatpush1.msra.mxu0 %v101
    %125 = vmatprep.subr.mxu0 0.0
    %126 = vmatpush1.msra.mxu0 %v102
    %127 = vmatprep.subr.mxu0 0.0
    %128 = vmatpush1.msra.mxu0 %v103
    %129 = vmatprep.subr.mxu0 0.0
    %130 = vmatpush1.msra.mxu0 %v104
    %131 = vmatprep.subr.mxu0 0.0
    %132 = vmatpush1.msra.mxu0 %v105
    %133 = vmatprep.subr.mxu0 0.0
    %134 = vmatpush1.msra.mxu0 %v106
    %135 = vmatprep.subr.mxu0 0.0
    %136 = vmatpush1.msra.mxu0 %v107
    %137 = vmatprep.subr.mxu0 0.0
    %138 = vmatpush1.msra.mxu0 %v108
    %139 = vmatprep.subr.mxu0 0.0
    %140 = vmatpush1.msra.mxu0 %v109
    %141 = vmatprep.subr.mxu0 0.0
    %142 = vmatpush1.msra.mxu0 %v110
    %143 = vmatprep.subr.mxu0 0.0
    %144 = vmatpush1.msra.mxu0 0.0
    %145 = vmatprep.subr.mxu0 0.0
    %146 = vmatpush1.msra.mxu0 0.0
    %147 = vmatprep.subr.mxu0 0.0
    %148 = vmatpush1.msra.mxu0 0.0
    %149 = vmatprep.subr.mxu0 0.0
    %150 = vmatpush1.msra.mxu0 0.0
    %151 = vmatprep.subr.mxu0 0.0
    %152 = vmatpush1.msra.mxu0 0.0
    %153 = vmatprep.subr.mxu0 0.0
    %154 = vmatpush1.msra.mxu0 0.0
    %155 = vmatprep.subr.mxu0 0.0
    %156 = vmatpush1.msra.mxu0 0.0
    %157 = vmatprep.subr.mxu0 0.0
    %158 = vmatpush1.msra.mxu0 0.0
    %159 = vmatprep.subr.mxu0 0.0
    %160 = vmatpush1.msra.mxu0 0.0
    %161 = vmatprep.subr.mxu0 0.0
    %162 = vmatpush1.msra.mxu0 0.0
    %163 = vmatprep.subr.mxu0 0.0
    %164 = vmatpush1.msra.mxu0 0.0
    %165 = vmatprep.subr.mxu0 0.0
    %166 = vmatpush1.msra.mxu0 0.0
    %167 = vmatprep.subr.mxu0 0.0
    %168 = vmatpush1.msra.mxu0 0.0
    %169 = vmatprep.subr.mxu0 0.0
    %170 = vmatpush1.msra.mxu0 0.0
    %171 = vmatprep.subr.mxu0 0.0
    %172 = vmatpush1.msra.mxu0 0.0
    %173 = vmatprep.subr.mxu0 0.0
    %174 = vmatpush1.msra.mxu0 0.0
    %175 = vmatprep.mubr.f32.mxu0 0.0
    %176 = vmatmul.mubr.f32.gmra.mrb[0].mxu0 %v60
    %v177 = vpop.f32.mrb[0].mxu0
    %v178 = vadd.f32 0.0, %v177
    %v179 = vpop.f32.mrb[0].mxu0
    %180 = vdwg.mxu0
    %181 = vmatprep.subr.mxu0 0.0
    %182 = vmatpush1.msra.mxu0 %v79
    %183 = vmatprep.subr.mxu0 0.0
    %184 = vmatpush1.msra.mxu0 %v80
    %185 = vmatprep.subr.mxu0 0.0
    %186 = vmatpush1.msra.mxu0 %v81
    %187 = vmatprep.subr.mxu0 0.0
    %188 = vmatpush1.msra.mxu0 %v82
    %189 = vmatprep.subr.mxu0 0.0
    %190 = vmatpush1.msra.mxu0 %v83
    %191 = vmatprep.subr.mxu0 0.0
    %192 = vmatpush1.msra.mxu0 %v84
    %193 = vmatprep.subr.mxu0 0.0
    %194 = vmatpush1.msra.mxu0 %v85
    %195 = vmatprep.subr.mxu0 0.0
    %196 = vmatpush1.msra.mxu0 %v86
    %197 = vmatprep.subr.mxu0 0.0
    %198 = vmatpush1.msra.mxu0 %v87
    %199 = vmatprep.subr.mxu0 0.0
    %200 = vmatpush1.msra.mxu0 %v88
    %201 = vmatprep.subr.mxu0 0.0
    %202 = vmatpush1.msra.mxu0 %v89
    %203 = vmatprep.subr.mxu0 0.0
    %204 = vmatpush1.msra.mxu0 %v90
    %205 = vmatprep.subr.mxu0 0.0
    %206 = vmatpush1.msra.mxu0 %v91
    %207 = vmatprep.subr.mxu0 0.0
    %208 = vmatpush1.msra.mxu0 %v92
    %209 = vmatprep.subr.mxu0 0.0
    %210 = vmatpush1.msra.mxu0 %v93
    %211 = vmatprep.subr.mxu0 0.0
    %212 = vmatpush1.msra.mxu0 %v94
    %213 = vmatprep.subr.mxu0 0.0
    %214 = vmatpush1.msra.mxu0 0.0
    %215 = vmatprep.subr.mxu0 0.0
    %216 = vmatpush1.msra.mxu0 0.0
    %217 = vmatprep.subr.mxu0 0.0
    %218 = vmatpush1.msra.mxu0 0.0
    %219 = vmatprep.subr.mxu0 0.0
    %220 = vmatpush1.msra.mxu0 0.0
    %221 = vmatprep.subr.mxu0 0.0
    %222 = vmatpush1.msra.mxu0 0.0
    %223 = vmatprep.subr.mxu0 0.0
    %224 = vmatpush1.msra.mxu0 0.0
    %225 = vmatprep.subr.mxu0 0.0
    %226 = vmatpush1.msra.mxu0 0.0
    %227 = vmatprep.subr.mxu0 0.0
    %228 = vmatpush1.msra.mxu0 0.0
    %229 = vmatprep.subr.mxu0 0.0
    %230 = vmatpush1.msra.mxu0 0.0
    %231 = vmatprep.subr.mxu0 0.0
    %232 = vmatpush1.msra.mxu0 0.0
    %233 = vmatprep.subr.mxu0 0.0
    %234 = vmatpush1.msra.mxu0 0.0
    %235 = vmatprep.subr.mxu0 0.0
    %236 = vmatpush1.msra.mxu0 0.0
    %237 = vmatprep.subr.mxu0 0.0
    %238 = vmatpush1.msra.mxu0 0.0
    %239 = vmatprep.subr.mxu0 0.0
    %240 = vmatpush1.msra.mxu0 0.0
    %241 = vmatprep.subr.mxu0 0.0
    %242 = vmatpush1.msra.mxu0 0.0
    %243 = vmatprep.subr.mxu0 0.0
    %244 = vmatpush1.msra.mxu0 0.0
    %245 = vmatprep.mubr.f32.mxu0 0.0
    %246 = vmatmul.mubr.f32.gmra.mrb[0].mxu0 %v78
    %v247 = vpop.f32.mrb[0].mxu0
    %v248 = vadd.f32 %v178, %v247
    %v249 = vpop.f32.mrb[0].mxu0
    %250 = vdwg.mxu0
    %v251 = vld [vmem:[%s5 + $0x1] sm:$0x1]
    %v252 = vlaneseq
    %v253 = vshrl.u32 %v252, 7
    %v254 = vsub.s32 0, %v253
    %v255 = vrot.slane %v251, %v254
    %v256 = vadd.f32 %v248, %v255
    %v257 = vld [vmem:[#allocation4] sm:$0xff]
    %v258 = vld [vmem:[#allocation4 + $0x8] sm:$0xff]
    %v259 = vld [vmem:[#allocation4 + $0x10] sm:$0xff]
    %v260 = vld [vmem:[#allocation4 + $0x18] sm:$0xff]
    %v261 = vld [vmem:[#allocation4 + $0x20] sm:$0xff]
    %v262 = vld [vmem:[#allocation4 + $0x28] sm:$0xff]
    %v263 = vld [vmem:[#allocation4 + $0x30] sm:$0xff]
    %v264 = vld [vmem:[#allocation4 + $0x38] sm:$0xff]
    %v265 = vld [vmem:[#allocation4 + $0x40] sm:$0xff]
    %v266 = vld [vmem:[#allocation4 + $0x48] sm:$0xff]
    %v267 = vld [vmem:[#allocation4 + $0x50] sm:$0xff]
    %v268 = vld [vmem:[#allocation4 + $0x58] sm:$0xff]
    %v269 = vld [vmem:[#allocation4 + $0x60] sm:$0xff]
    %v270 = vld [vmem:[#allocation4 + $0x68] sm:$0xff]
    %v271 = vld [vmem:[#allocation4 + $0x70] sm:$0xff]
    %v272 = vld [vmem:[#allocation4 + $0x78] sm:$0xff]
    %v273 = vld [vmem:[#allocation4 + $0x80] sm:$0xff]
    %v274 = vld [vmem:[#allocation4 + $0x88] sm:$0xff]
    %v275 = vld [vmem:[#allocation4 + $0x90] sm:$0xff]
    %v276 = vld [vmem:[#allocation4 + $0x98] sm:$0xff]
    %v277 = vld [vmem:[#allocation4 + $0xa0] sm:$0xff]
    %v278 = vld [vmem:[#allocation4 + $0xa8] sm:$0xff]
    %v279 = vld [vmem:[#allocation4 + $0xb0] sm:$0xff]
    %v280 = vld [vmem:[#allocation4 + $0xb8] sm:$0xff]
    %v281 = vld [vmem:[#allocation4 + $0xc0] sm:$0xff]
    %v282 = vld [vmem:[#allocation4 + $0xc8] sm:$0xff]
    %v283 = vld [vmem:[#allocation4 + $0xd0] sm:$0xff]
    %v284 = vld [vmem:[#allocation4 + $0xd8] sm:$0xff]
    %v285 = vld [vmem:[#allocation4 + $0xe0] sm:$0xff]
    %v286 = vld [vmem:[#allocation4 + $0xe8] sm:$0xff]
    %v287 = vld [vmem:[#allocation4 + $0xf0] sm:$0xff]
    %v288 = vld [vmem:[#allocation4 + $0xf8] sm:$0xff]
    %v289 = vld [vmem:[#allocation4 + $0x100] sm:$0xff]
    %v290 = vld [vmem:[#allocation4 + $0x108] sm:$0xff]
    %v291 = vld [vmem:[#allocation4 + $0x110] sm:$0xff]
    %v292 = vld [vmem:[#allocation4 + $0x118] sm:$0xff]
    %v293 = vld [vmem:[#allocation4 + $0x120] sm:$0xff]
    %v294 = vld [vmem:[#allocation4 + $0x128] sm:$0xff]
    %v295 = vld [vmem:[#allocation4 + $0x130] sm:$0xff]
    %v296 = vld [vmem:[#allocation4 + $0x138] sm:$0xff]
    %v297 = vld [vmem:[#allocation4 + $0x140] sm:$0xff]
    %v298 = vld [vmem:[#allocation4 + $0x148] sm:$0xff]
    %v299 = vld [vmem:[#allocation4 + $0x150] sm:$0xff]
    %v300 = vld [vmem:[#allocation4 + $0x158] sm:$0xff]
    %v301 = vld [vmem:[#allocation4 + $0x160] sm:$0xff]
    %v302 = vld [vmem:[#allocation4 + $0x168] sm:$0xff]
    %v303 = vld [vmem:[#allocation4 + $0x170] sm:$0xff]
    %v304 = vld [vmem:[#allocation4 + $0x178] sm:$0xff]
    %v305 = vld [vmem:[%s6] ss:$2 sm:$0x7]
    %v307 = vlaneseq
    %v308 = vshrl.u32 %v307, 7
    %v309 = vsub.s32 0, %v308
    %v310 = vrot.slane %v305, %v309
    %v311 = vlaneseq
    %v312 = vshrl.u32 %v311, 7
    %v313 = vsub.s32 1, %v312
    %v314 = vrot.slane %v305, %v313
    %v315 = vlaneseq
    %v316 = vshrl.u32 %v315, 7
    %v317 = vsub.s32 2, %v316
    %v318 = vrot.slane %v305, %v317
    %322 = vmatprep.subr.mxu0 %v258
    %323 = vmatpush1.msra.mxu0 %v257
    %324 = vmatprep.subr.mxu0 %v261
    %325 = vmatpush1.msra.mxu0 %v260
    %326 = vmatprep.subr.mxu0 %v264
    %327 = vmatpush1.msra.mxu0 %v263
    %328 = vmatprep.subr.mxu0 %v267
    %329 = vmatpush1.msra.mxu0 %v266
    %330 = vmatprep.subr.mxu0 %v270
    %331 = vmatpush1.msra.mxu0 %v269
    %332 = vmatprep.subr.mxu0 %v273
    %333 = vmatpush1.msra.mxu0 %v272
    %334 = vmatprep.subr.mxu0 %v276
    %335 = vmatpush1.msra.mxu0 %v275
    %336 = vmatprep.subr.mxu0 %v279
    %337 = vmatpush1.msra.mxu0 %v278
    %338 = vmatprep.subr.mxu0 %v282
    %339 = vmatpush1.msra.mxu0 %v281
    %340 = vmatprep.subr.mxu0 %v285
    %341 = vmatpush1.msra.mxu0 %v284
    %342 = vmatprep.subr.mxu0 %v288
    %343 = vmatpush1.msra.mxu0 %v287
    %344 = vmatprep.subr.mxu0 %v291
    %345 = vmatpush1.msra.mxu0 %v290
    %346 = vmatprep.subr.mxu0 %v294
    %347 = vmatpush1.msra.mxu0 %v293
    %348 = vmatprep.subr.mxu0 %v297
    %349 = vmatpush1.msra.mxu0 %v296
    %350 = vmatprep.subr.mxu0 %v300
    %351 = vmatpush1.msra.mxu0 %v299
    %352 = vmatprep.subr.mxu0 %v303
    %353 = vmatpush1.msra.mxu0 %v302
    %354 = vmatprep.subr.mxu0 0.0
    %355 = vmatpush1.msra.mxu0 0.0
    %356 = vmatprep.subr.mxu0 0.0
    %357 = vmatpush1.msra.mxu0 0.0
    %358 = vmatprep.subr.mxu0 0.0
    %359 = vmatpush1.msra.mxu0 0.0
    %360 = vmatprep.subr.mxu0 0.0
    %361 = vmatpush1.msra.mxu0 0.0
    %362 = vmatprep.subr.mxu0 0.0
    %363 = vmatpush1.msra.mxu0 0.0
    %364 = vmatprep.subr.mxu0 0.0
    %365 = vmatpush1.msra.mxu0 0.0
    %366 = vmatprep.subr.mxu0 0.0
    %367 = vmatpush1.msra.mxu0 0.0
    %368 = vmatprep.subr.mxu0 0.0
    %369 = vmatpush1.msra.mxu0 0.0
    %370 = vmatprep.subr.mxu0 0.0
    %371 = vmatpush1.msra.mxu0 0.0
    %372 = vmatprep.subr.mxu0 0.0
    %373 = vmatpush1.msra.mxu0 0.0
    %374 = vmatprep.subr.mxu0 0.0
    %375 = vmatpush1.msra.mxu0 0.0
    %376 = vmatprep.subr.mxu0 0.0
    %377 = vmatpush1.msra.mxu0 0.0
    %378 = vmatprep.subr.mxu0 0.0
    %379 = vmatpush1.msra.mxu0 0.0
    %380 = vmatprep.subr.mxu0 0.0
    %381 = vmatpush1.msra.mxu0 0.0
    %382 = vmatprep.subr.mxu0 0.0
    %383 = vmatpush1.msra.mxu0 0.0
    %384 = vmatprep.subr.mxu0 0.0
    %385 = vmatpush1.msra.mxu0 0.0
    %386 = vmatprep.mubr.f32.mxu0 0.0
    %387 = vmatmul.mubr.f32.gmra.mrb[0].mxu0 %v256
    %v388 = vpop.f32.mrb[0].mxu0
    %v389 = vadd.f32 %v310, %v388
    %v390 = vpop.f32.mrb[0].mxu0
    %v391 = vadd.f32 %v314, %v390
    %392 = vdwg.mxu0
    %393 = vmatprep.subr.mxu0 0.0
    %394 = vmatpush1.msra.mxu0 %v259
    %395 = vmatprep.subr.mxu0 0.0
    %396 = vmatpush1.msra.mxu0 %v262
    %397 = vmatprep.subr.mxu0 0.0
    %398 = vmatpush1.msra.mxu0 %v265
    %399 = vmatprep.subr.mxu0 0.0
    %400 = vmatpush1.msra.mxu0 %v268
    %401 = vmatprep.subr.mxu0 0.0
    %402 = vmatpush1.msra.mxu0 %v271
    %403 = vmatprep.subr.mxu0 0.0
    %404 = vmatpush1.msra.mxu0 %v274
    %405 = vmatprep.subr.mxu0 0.0
    %406 = vmatpush1.msra.mxu0 %v277
    %407 = vmatprep.subr.mxu0 0.0
    %408 = vmatpush1.msra.mxu0 %v280
    %409 = vmatprep.subr.mxu0 0.0
    %410 = vmatpush1.msra.mxu0 %v283
    %411 = vmatprep.subr.mxu0 0.0
    %412 = vmatpush1.msra.mxu0 %v286
    %413 = vmatprep.subr.mxu0 0.0
    %414 = vmatpush1.msra.mxu0 %v289
    %415 = vmatprep.subr.mxu0 0.0
    %416 = vmatpush1.msra.mxu0 %v292
    %417 = vmatprep.subr.mxu0 0.0
    %418 = vmatpush1.msra.mxu0 %v295
    %419 = vmatprep.subr.mxu0 0.0
    %420 = vmatpush1.msra.mxu0 %v298
    %421 = vmatprep.subr.mxu0 0.0
    %422 = vmatpush1.msra.mxu0 %v301
    %423 = vmatprep.subr.mxu0 0.0
    %424 = vmatpush1.msra.mxu0 %v304
    %425 = vmatprep.subr.mxu0 0.0
    %426 = vmatpush1.msra.mxu0 0.0
    %427 = vmatprep.subr.mxu0 0.0
    %428 = vmatpush1.msra.mxu0 0.0
    %429 = vmatprep.subr.mxu0 0.0
    %430 = vmatpush1.msra.mxu0 0.0
    %431 = vmatprep.subr.mxu0 0.0
    %432 = vmatpush1.msra.mxu0 0.0
    %433 = vmatprep.subr.mxu0 0.0
    %434 = vmatpush1.msra.mxu0 0.0
    %435 = vmatprep.subr.mxu0 0.0
    %436 = vmatpush1.msra.mxu0 0.0
    %437 = vmatprep.subr.mxu0 0.0
    %438 = vmatpush1.msra.mxu0 0.0
    %439 = vmatprep.subr.mxu0 0.0
    %440 = vmatpush1.msra.mxu0 0.0
    %441 = vmatprep.subr.mxu0 0.0
    %442 = vmatpush1.msra.mxu0 0.0
    %443 = vmatprep.subr.mxu0 0.0
    %444 = vmatpush1.msra.mxu0 0.0
    %445 = vmatprep.subr.mxu0 0.0
    %446 = vmatpush1.msra.mxu0 0.0
    %447 = vmatprep.subr.mxu0 0.0
    %448 = vmatpush1.msra.mxu0 0.0
    %449 = vmatprep.subr.mxu0 0.0
    %450 = vmatpush1.msra.mxu0 0.0
    %451 = vmatprep.subr.mxu0 0.0
    %452 = vmatpush1.msra.mxu0 0.0
    %453 = vmatprep.subr.mxu0 0.0
    %454 = vmatpush1.msra.mxu0 0.0
    %455 = vmatprep.subr.mxu0 0.0
    %456 = vmatpush1.msra.mxu0 0.0
    %457 = vmatprep.mubr.f32.mxu0 0.0
    %458 = vmatmul.mubr.f32.gmra.mrb[0].mxu0 %v256
    %v459 = vpop.f32.mrb[0].mxu0
    %v460 = vadd.f32 %v318, %v459
    %v461 = vpop.f32.mrb[0].mxu0
    %462 = vdwg.mxu0
    %v463 = vld [vmem:[%s6 + $0x1] sm:$0x1]
    %v464 = vmax.f32 %v463, 0.0
    %v465 = vsub.f32 0.0, %v464
    %v466 = vld [vmem:[%s4] sm:$0xff]
    %v467 = vlaneseq
    %v468 = vshrl.u32 %v467, 7
    %v469 = vsub.s32 0, %v468
    %v470 = vrot.slane %v465, %v469
    %472 = vset.pattern.permute.xlu0 0
    %473 = vperm.xlu0 %472, %v466
    %v474 = vpop.permute.xlu0 %473
    %v476 = vmul.f32 %v470, %v474
    %v477 = vmul.f32 %v476, 1.442695
    %v478 = vpow.pop %v477
    %479 = vst [vmem:[%s9] sm:$0xff] %v389
    %480 = vst [vmem:[%s9 + $0x8] sm:$0xff] %v391
    %481 = vst [vmem:[%s9 + $0x10] sm:$0xff] %v460
    %482 = vst [vmem:[%s9 + $0x18] sm:$0xff] %v478
    // Predicated region
    $region46: #{grud_forward_sequence.3} parent=1 // pred_check
      _
    $region47: #{grud_forward_sequence.3} parent=1 // pred_check_branch
      %484 = sbr.rel (0) target = $region49
    $region48: #{grud_forward_sequence.3} parent=1 // pred_region
      _
    $region49: #{grud_forward_sequence.3} parent=1 // pred_fallthru
      _
    // Predicated region
    $region50: #{grud_forward_sequence.3} parent=1 // pred_check
      _
    $region51: #{grud_forward_sequence.3} parent=1 // pred_check_branch
      %486 = sbr.rel (0) target = $region53
    $region52: #{grud_forward_sequence.3} parent=1 // pred_region
      _
    $region53: #{grud_forward_sequence.3} parent=1 // pred_fallthru
      _
    %487 = vsyncpa [#allocation3], 1
    %488 = vsyncpa [#allocation5], 1

</llo_original>
